<compile_context>
chip_gen: v7x
topology: tpu7x:2x2x1
jax: 0.10.0
libtpu: 0.0.40
codegen_flags: <defaults>
</compile_context>

<pallas_src>
import jax
import jax.numpy as jnp
from jax import lax
from jax.experimental import pallas as pl
from jax.experimental.pallas import tpu as pltpu


def _pk_offsets(h1, h2, e):
    """128-lane-aligned offsets of [b1 | b2(pad to h1) | bs1 | bs2 | wo] in one row."""
    c = lambda n: -(-n // 128) * 128
    o_b1 = 0
    o_b2 = o_b1 + c(h1)
    o_bs1 = o_b2 + c(h1)
    o_bs2 = o_bs1 + c(h2)
    o_wo = o_bs2 + c(e)
    return o_b1, o_b2, o_bs1, o_bs2, o_wo, o_wo + c(e)


def ssin_kernel(sc_ref, spect_ref, refst_ref, wslab_ref, ws1_ref, ws2_ref,
                pk_ref, out_ref):
    B, L = spect_ref.shape
    R = refst_ref.shape[1]
    H1 = wslab_ref.shape[1]            # 128
    H2 = ws1_ref.shape[1]              # 1024
    E = ws2_ref.shape[1]               # dim_emb

    f32 = jnp.float32
    bf16 = jnp.bfloat16

    # true scalars from SMEM (no (1,1)-vreg broadcasts)
    ba = sc_ref[0]
    wa_sum = sc_ref[1]
    bo = sc_ref[2]

    # bf16 weight slab rows: [w1 (R,128) | w2 padded (128,128) | wz padded (128,128)]
    w1 = wslab_ref[0:R, :]
    w2p = wslab_ref[R:R + H1, :]
    wzp = wslab_ref[R + H1:R + 2 * H1, :]

    # packed f32 bias row (128-aligned segments)
    o_b1, o_b2, o_bs1, o_bs2, o_wo, _ = _pk_offsets(H1, H2, E)
    b1 = pk_ref[:, o_b1:o_b1 + H1]
    b2p = pk_ref[:, o_b2:o_b2 + H1]          # zero-padded past col 32
    bs1 = pk_ref[:, o_bs1:o_bs1 + H2]
    bs2 = pk_ref[:, o_bs2:o_bs2 + E]
    wo = pk_ref[:, o_wo:o_wo + E]            # fc_out weight row

    spect = spect_ref[...]                   # (B, L) f32
    refst = refst_ref[...]                   # (L, R) f32

    # --- similarity features: the (+1) offsets cancel; sigmoid(-d^2)==1/(1+exp(d^2))
    d = spect[:, :, None] - refst[None, :, :]            # (B, L, R)
    x2 = jax.nn.sigmoid(-(d * d)).reshape(B * L, R)      # merge leading dims only

    # --- fc_feat: Linear(R,128)->ReLU->[Dropout=id]->Linear(128,32 pad 128)->ReLU ---
    h1 = jnp.maximum(
        jnp.dot(x2.astype(bf16), w1, preferred_element_type=f32) + b1, 0.0)
    z2 = jnp.maximum(
        jnp.dot(h1.astype(bf16), w2p, preferred_element_type=f32) + b2p, 0.0)

    # fused fc_attn projection + feature-sum: cols 0/1 of  z2 @ [wa | ones | 0...]
    az = jnp.dot(z2.astype(bf16), wzp, preferred_element_type=f32)   # (B*L, 128)

    # --- (B*L,1) -> (B,L) relayout done on the MXU with tiny selector matrices ---
    eye_l = (lax.broadcasted_iota(jnp.int32, (L, L), 0) ==
             lax.broadcasted_iota(jnp.int32, (L, L), 1)).astype(f32)
    onehot = jnp.concatenate([eye_l] * B, axis=0)                    # (B*L, L)
    j_i = lax.broadcasted_iota(jnp.int32, (B, B * L), 1)
    b_i = lax.broadcasted_iota(jnp.int32, (B, B * L), 0)
    sel_b = jnp.where((j_i >= b_i * L) & (j_i < (b_i + 1) * L), 1.0, 0.0)  # (B, B*L)
    m2 = jnp.concatenate([az[:, 0:1] * onehot, az[:, 1:2] * onehot], axis=1)
    pq = jnp.dot(sel_b, m2, preferred_element_type=f32)              # (B, 2L)
    a_proj = pq[:, 0:L]                                              # z @ wa
    zsum = pq[:, L:2 * L]                                            # sum(z, dim=2)

    # --- attention: fc_attn(spect[...,None]+z) == sigmoid(z@wa + spect*sum(wa)+ba) ---
    a = jax.nn.sigmoid(a_proj + wa_sum * spect + ba)
    attns_un = spect * jnp.exp(a)
    denom = jnp.sum(attns_un, axis=1, keepdims=True) + 1e-10
    s_un = attns_un * (spect + zsum)                                 # (B, L)

    # --- fc_seq with softmax normalization folded through by linearity ---
    h_un = jnp.dot(s_un.astype(bf16), ws1_ref[...], preferred_element_type=f32)
    inv_d = 1.0 / denom                      # exact reciprocal (only B values)
    attns = attns_un * inv_d
    h = h_un * inv_d + bs1
    h = jnp.where(h > 0, h, 0.01 * h)        # LeakyReLU, [Dropout=id]
    ze = jnp.dot(h.astype(bf16), ws2_ref[...], preferred_element_type=f32) + bs2
    ze = jnp.where(ze > 0, ze, 0.01 * ze)    # (B, E)

    # --- L2 normalize (F.normalize p=2): rsqrt + one Newton step, then fc_out ---
    ss = jnp.sum(ze * ze, axis=1, keepdims=True)
    ssafe = jnp.maximum(ss, 1e-24)           # == 1/max(||ze||, 1e-12)
    inv_n = lax.rsqrt(ssafe)
    inv_n = inv_n * (1.5 - 0.5 * ssafe * inv_n * inv_n)
    zn = ze * inv_n
    out = jnp.sum(zn * wo, axis=1, keepdims=True) + bo               # (B, 1)

    # --- lane-aligned output segments: [out @0 | attns @128 | zn @256] ---
    out_ref[:, 0:1] = out
    out_ref[:, H1:H1 + L] = attns
    out_ref[:, 2 * H1:2 * H1 + E] = zn


def prepare_params(params):
    """One-time, offline packing of all parameter-derived kernel inputs."""
    bf16 = jnp.bfloat16
    w1 = params["w1"]                       # (R, 128)
    w2 = params["w2"]                       # (128, 32)
    wa = params["wa"]                       # (32, 1)
    R, H1 = w1.shape
    F = w2.shape[1]
    H2 = params["ws1"].shape[1]
    E = params["ws2"].shape[1]

    # bf16 weight slab: [w1 | w2 padded to (128,128) | wz padded to (128,128)]
    w2p = jnp.zeros((H1, H1), jnp.float32).at[:, :F].set(w2)
    wzp = jnp.zeros((H1, H1), jnp.float32)
    wzp = wzp.at[:F, 0].set(wa[:, 0])       # col 0: fc_attn weight
    wzp = wzp.at[:F, 1].set(1.0)            # col 1: ones  -> feature sum
    wslab = jnp.concatenate([w1, w2p, wzp], axis=0).astype(bf16)

    # f32 packed bias / fc_out row with 128-aligned segments
    o_b1, o_b2, o_bs1, o_bs2, o_wo, total = _pk_offsets(H1, H2, E)
    packed = jnp.zeros((1, total), jnp.float32)
    packed = packed.at[:, o_b1:o_b1 + H1].set(params["b1"])
    packed = packed.at[:, o_b2:o_b2 + F].set(params["b2"])
    packed = packed.at[:, o_bs1:o_bs1 + H2].set(params["bs1"])
    packed = packed.at[:, o_bs2:o_bs2 + E].set(params["bs2"])
    packed = packed.at[:, o_wo:o_wo + E].set(params["wo"].reshape(1, E))

    scalars = jnp.stack([params["ba"].reshape(()),
                         jnp.sum(params["wa"]),
                         params["bo"].reshape(())]).astype(jnp.float32)

    return dict(wslab=wslab,
                ws1=params["ws1"].astype(bf16),
                ws2=params["ws2"].astype(bf16),
                packed=packed,
                scalars=scalars)


@jax.jit
def ssin_forward(spect, refs, prep):
    """spect: (B,L) f32, refs: (R,L) f32, prep: prepare_params(...) output.
    Returns (out (B,1), attns (B,L), z (B,E))."""
    B, L = spect.shape
    E = prep["ws2"].shape[1]
    refs_t = refs.T                          # (L, R) -- only per-call XLA glue

    vmem = pl.BlockSpec(memory_space=pltpu.MemorySpace.VMEM)
    smem = pl.BlockSpec(memory_space=pltpu.MemorySpace.SMEM)
    # TODO(synk): for large batches add a "parallel" grid over B*L row tiles
    # (megacore on v7x) and keep ws1/ws2 resident via constant index_maps.
    res = pl.pallas_call(
        ssin_kernel,
        out_shape=jax.ShapeDtypeStruct((B, 3 * 128), jnp.float32),
        in_specs=[smem, vmem, vmem, vmem, vmem, vmem, vmem],
        out_specs=vmem,
    )(prep["scalars"], spect, refs_t, prep["wslab"], prep["ws1"],
      prep["ws2"], prep["packed"])
    return res[:, 0:1], res[:, 128:128 + L], res[:, 256:256 + E]


def init_params(key, len_spect, n_refs, dim_emb):
    """Deterministic synthetic parameters (torch.nn.Linear-style uniform init)."""
    def linear(k, fin, fout):
        kw, kb = jax.random.split(k)
        bound = 1.0 / jnp.sqrt(jnp.float32(fin))
        w = jax.random.uniform(kw, (fin, fout), jnp.float32, -bound, bound)
        b = jax.random.uniform(kb, (1, fout), jnp.float32, -bound, bound)
        return w, b

    k = jax.random.split(key, 6)
    w1, b1 = linear(k[0], n_refs, 128)        # fc_feat[0]
    w2, b2 = linear(k[1], 128, 32)            # fc_feat[3]
    wa, ba = linear(k[2], 32, 1)              # fc_attn[0]
    ws1, bs1 = linear(k[3], len_spect, 1024)  # fc_seq[0]
    ws2, bs2 = linear(k[4], 1024, dim_emb)    # fc_seq[3]
    wo, bo = linear(k[5], dim_emb, 1)         # fc_out
    return dict(w1=w1, b1=b1, w2=w2, b2=b2, wa=wa, ba=ba,
                ws1=ws1, bs1=bs1, ws2=ws2, bs2=bs2, wo=wo, bo=bo)


def ssin_reference(spect, refs, params):
    """Pure-JAX f32 reference of the PyTorch forward (eval mode) for validation."""
    d = spect[:, :, None] - refs.T[None, :, :]
    x = 1.0 / (1.0 + jnp.exp(d * d))
    h1 = jnp.maximum(x @ params["w1"] + params["b1"], 0.0)
    z3 = jnp.maximum(h1 @ params["w2"] + params["b2"], 0.0)
    a = jax.nn.sigmoid(((spect[:, :, None] + z3) @ params["wa"])[..., 0]
                       + params["ba"][0, 0])
    attns = spect * jnp.exp(a)
    attns = attns / (jnp.sum(attns, axis=1, keepdims=True) + 1e-10)
    s = attns * (spect + jnp.sum(z3, axis=2))
    h = s @ params["ws1"] + params["bs1"]
    h = jnp.where(h > 0, h, 0.01 * h)
    ze = h @ params["ws2"] + params["bs2"]
    ze = jnp.where(ze > 0, ze, 0.01 * ze)
    zn = ze / jnp.maximum(jnp.sqrt(jnp.sum(ze * ze, axis=1, keepdims=True)), 1e-12)
    out = zn @ params["wo"] + params["bo"][0, 0]
    return out, attns, zn


if __name__ == "__main__":
    B, L, R, E = 4, 16, 8, 32   # batch, len_spect, num positive refs, dim_emb
    key = jax.random.PRNGKey(0)
    k_spect, k_refs, k_params = jax.random.split(key, 3)

    spect = jax.random.uniform(k_spect, (B, L), jnp.float32, 0.0, 1.0)
    refs = jax.random.uniform(k_refs, (R, L), jnp.float32, 0.0, 1.0)
    params = init_params(k_params, L, R, E)

    prep = prepare_params(params)            # one-time, outside the hot path
    out, attns, z = ssin_forward(spect, refs, prep)
    jax.block_until_ready((out, attns, z))

    out_r, attns_r, z_r = ssin_reference(spect, refs, params)
    # tolerance sized for bf16 MXU operands (f32 accumulation)
    assert jnp.allclose(out, out_r, atol=3e-2, rtol=3e-2)
    assert jnp.allclose(attns, attns_r, atol=3e-2, rtol=3e-2)
    assert jnp.allclose(z, z_r, atol=3e-2, rtol=3e-2)

    print("KERNEL_OK")
</pallas_src>

<mosaic_0001>
module attributes {stable_mosaic.version = 11 : i64} {
  func.func @ssin_kernel(%arg0: memref<3xf32, #tpu.memory_space<smem>>, %arg1: memref<4x16xf32, #tpu.memory_space<vmem>>, %arg2: memref<16x8xf32, #tpu.memory_space<vmem>>, %arg3: memref<264x128xbf16, #tpu.memory_space<vmem>>, %arg4: memref<16x1024xbf16, #tpu.memory_space<vmem>>, %arg5: memref<1024x32xbf16, #tpu.memory_space<vmem>>, %arg6: memref<1x1536xf32, #tpu.memory_space<vmem>>, %arg7: memref<4x384xf32, #tpu.memory_space<vmem>>) attributes {dimension_semantics = [], scalar_prefetch = 0 : i64, scratch_operands = 0 : i64, tpu.core_type = #tpu.core_type<tc>} {
    %c0 = arith.constant 0 : index
    %0 = memref.load %arg0[%c0] : memref<3xf32, #tpu.memory_space<smem>>
    %c1 = arith.constant 1 : index
    %1 = memref.load %arg0[%c1] : memref<3xf32, #tpu.memory_space<smem>>
    %c2 = arith.constant 2 : index
    %2 = memref.load %arg0[%c2] : memref<3xf32, #tpu.memory_space<smem>>
    %c0_0 = arith.constant 0 : index
    %c0_1 = arith.constant 0 : index
    %3 = vector.load %arg3[%c0_0, %c0_1] : memref<264x128xbf16, #tpu.memory_space<vmem>>, vector<8x128xbf16>
    %c8 = arith.constant 8 : index
    %c0_2 = arith.constant 0 : index
    %4 = vector.load %arg3[%c8, %c0_2] : memref<264x128xbf16, #tpu.memory_space<vmem>>, vector<128x128xbf16>
    %c136 = arith.constant 136 : index
    %c0_3 = arith.constant 0 : index
    %5 = vector.load %arg3[%c136, %c0_3] : memref<264x128xbf16, #tpu.memory_space<vmem>>, vector<128x128xbf16>
    %c0_4 = arith.constant 0 : index
    %c0_5 = arith.constant 0 : index
    %6 = vector.load %arg6[%c0_4, %c0_5] : memref<1x1536xf32, #tpu.memory_space<vmem>>, vector<1x128xf32>
    %c0_6 = arith.constant 0 : index
    %c128 = arith.constant 128 : index
    %7 = vector.load %arg6[%c0_6, %c128] : memref<1x1536xf32, #tpu.memory_space<vmem>>, vector<1x128xf32>
    %c0_7 = arith.constant 0 : index
    %c256 = arith.constant 256 : index
    %8 = vector.load %arg6[%c0_7, %c256] : memref<1x1536xf32, #tpu.memory_space<vmem>>, vector<1x1024xf32>
    %c0_8 = arith.constant 0 : index
    %c1280 = arith.constant 1280 : index
    %9 = vector.load %arg6[%c0_8, %c1280] : memref<1x1536xf32, #tpu.memory_space<vmem>>, vector<1x32xf32>
    %c0_9 = arith.constant 0 : index
    %c1408 = arith.constant 1408 : index
    %10 = vector.load %arg6[%c0_9, %c1408] : memref<1x1536xf32, #tpu.memory_space<vmem>>, vector<1x32xf32>
    %c0_10 = arith.constant 0 : index
    %c0_11 = arith.constant 0 : index
    %11 = vector.load %arg1[%c0_10, %c0_11] : memref<4x16xf32, #tpu.memory_space<vmem>>, vector<4x16xf32>
    %c0_12 = arith.constant 0 : index
    %c0_13 = arith.constant 0 : index
    %12 = vector.load %arg2[%c0_12, %c0_13] : memref<16x8xf32, #tpu.memory_space<vmem>>, vector<16x8xf32>
    %13 = vector.shape_cast %11 : vector<4x16xf32> to vector<4x16x1xf32>
    %14 = vector.shape_cast %12 : vector<16x8xf32> to vector<1x16x8xf32>
    %15 = vector.broadcast %13 : vector<4x16x1xf32> to vector<4x16x8xf32>
    %16 = vector.broadcast %14 : vector<1x16x8xf32> to vector<4x16x8xf32>
    %17 = arith.subf %15, %16 : vector<4x16x8xf32>
    %18 = arith.mulf %17, %17 : vector<4x16x8xf32>
    %cst = arith.constant 0.000000e+00 : f32
    %19 = vector.broadcast %cst : f32 to vector<4x16x8xf32>
    %20 = arith.subf %19, %18 : vector<4x16x8xf32>
    %21 = arith.negf %20 : vector<4x16x8xf32>
    %22 = math.exp %21 : vector<4x16x8xf32>
    %cst_14 = arith.constant 1.000000e+00 : f32
    %23 = vector.broadcast %cst_14 : f32 to vector<4x16x8xf32>
    %24 = arith.addf %23, %22 : vector<4x16x8xf32>
    %25 = arith.divf %23, %24 : vector<4x16x8xf32>
    %26 = vector.shape_cast %25 : vector<4x16x8xf32> to vector<64x8xf32>
    %27 = arith.truncf %26 : vector<64x8xf32> to vector<64x8xbf16>
    %cst_15 = arith.constant dense<0.000000e+00> : vector<64x128xf32>
    %28 = tpu.matmul %27, %3, %cst_15 {dimension_numbers = #tpu.dot_dimension_numbers<[1], [0], [0], [1], [0, 0, 1, 1], [], []>} : vector<64x8xbf16>, vector<8x128xbf16>, vector<64x128xf32> -> vector<64x128xf32>
    %29 = vector.broadcast %6 : vector<1x128xf32> to vector<64x128xf32>
    %30 = arith.addf %28, %29 : vector<64x128xf32>
    %cst_16 = arith.constant 0.000000e+00 : f32
    %31 = vector.broadcast %cst_16 : f32 to vector<64x128xf32>
    %32 = arith.maximumf %30, %31 : vector<64x128xf32>
    %33 = arith.truncf %32 : vector<64x128xf32> to vector<64x128xbf16>
    %cst_17 = arith.constant dense<0.000000e+00> : vector<64x128xf32>
    %34 = tpu.matmul %33, %4, %cst_17 {dimension_numbers = #tpu.dot_dimension_numbers<[1], [0], [0], [1], [0, 0, 1, 1], [], []>} : vector<64x128xbf16>, vector<128x128xbf16>, vector<64x128xf32> -> vector<64x128xf32>
    %35 = vector.broadcast %7 : vector<1x128xf32> to vector<64x128xf32>
    %36 = arith.addf %34, %35 : vector<64x128xf32>
    %cst_18 = arith.constant 0.000000e+00 : f32
    %37 = vector.broadcast %cst_18 : f32 to vector<64x128xf32>
    %38 = arith.maximumf %36, %37 : vector<64x128xf32>
    %39 = arith.truncf %38 : vector<64x128xf32> to vector<64x128xbf16>
    %cst_19 = arith.constant dense<0.000000e+00> : vector<64x128xf32>
    %40 = tpu.matmul %39, %5, %cst_19 {dimension_numbers = #tpu.dot_dimension_numbers<[1], [0], [0], [1], [0, 0, 1, 1], [], []>} : vector<64x128xbf16>, vector<128x128xbf16>, vector<64x128xf32> -> vector<64x128xf32>
    %41 = tpu.iota {dimensions = array<i32: 0>} : vector<16x16xi32>
    %42 = tpu.iota {dimensions = array<i32: 1>} : vector<16x16xi32>
    %43 = arith.cmpi eq, %41, %42 : vector<16x16xi32>
    %44 = arith.extui %43 : vector<16x16xi1> to vector<16x16xi32>
    %45 = arith.sitofp %44 : vector<16x16xi32> to vector<16x16xf32>
    %46 = tpu.concatenate %45, %45, %45, %45 in 0 : vector<16x16xf32>, vector<16x16xf32>, vector<16x16xf32>, vector<16x16xf32> -> vector<64x16xf32>
    %47 = tpu.iota {dimensions = array<i32: 1>} : vector<4x64xi32>
    %48 = tpu.iota {dimensions = array<i32: 0>} : vector<4x64xi32>
    %c16_i32 = arith.constant 16 : i32
    %49 = vector.broadcast %c16_i32 : i32 to vector<4x64xi32>
    %50 = arith.muli %48, %49 : vector<4x64xi32>
    %51 = arith.cmpi sge, %47, %50 : vector<4x64xi32>
    %c1_i32 = arith.constant 1 : i32
    %52 = vector.broadcast %c1_i32 : i32 to vector<4x64xi32>
    %53 = arith.addi %48, %52 : vector<4x64xi32>
    %c16_i32_20 = arith.constant 16 : i32
    %54 = vector.broadcast %c16_i32_20 : i32 to vector<4x64xi32>
    %55 = arith.muli %53, %54 : vector<4x64xi32>
    %56 = arith.cmpi slt, %47, %55 : vector<4x64xi32>
    %57 = arith.andi %51, %56 : vector<4x64xi1>
    %cst_21 = arith.constant 1.000000e+00 : f32
    %cst_22 = arith.constant 0.000000e+00 : f32
    %58 = vector.broadcast %cst_21 : f32 to vector<4x64xf32>
    %59 = vector.broadcast %cst_22 : f32 to vector<4x64xf32>
    %60 = arith.select %57, %58, %59 : vector<4x64xi1>, vector<4x64xf32>
    %61 = vector.extract_strided_slice %40 {offsets = [0, 0], sizes = [64, 1], strides = [1, 1]} : vector<64x128xf32> to vector<64x1xf32>
    %62 = vector.broadcast %61 : vector<64x1xf32> to vector<64x16xf32>
    %63 = arith.mulf %62, %46 : vector<64x16xf32>
    %64 = vector.extract_strided_slice %40 {offsets = [0, 1], sizes = [64, 1], strides = [1, 1]} : vector<64x128xf32> to vector<64x1xf32>
    %65 = vector.broadcast %64 : vector<64x1xf32> to vector<64x16xf32>
    %66 = arith.mulf %65, %46 : vector<64x16xf32>
    %67 = tpu.concatenate %63, %66 in 1 : vector<64x16xf32>, vector<64x16xf32> -> vector<64x32xf32>
    %cst_23 = arith.constant dense<0.000000e+00> : vector<4x32xf32>
    %68 = tpu.matmul %60, %67, %cst_23 {dimension_numbers = #tpu.dot_dimension_numbers<[1], [0], [0], [1], [0, 0, 1, 1], [], []>} : vector<4x64xf32>, vector<64x32xf32>, vector<4x32xf32> -> vector<4x32xf32>
    %69 = vector.extract_strided_slice %68 {offsets = [0, 0], sizes = [4, 16], strides = [1, 1]} : vector<4x32xf32> to vector<4x16xf32>
    %70 = vector.extract_strided_slice %68 {offsets = [0, 16], sizes = [4, 16], strides = [1, 1]} : vector<4x32xf32> to vector<4x16xf32>
    %71 = vector.broadcast %1 : f32 to vector<4x16xf32>
    %72 = arith.mulf %71, %11 : vector<4x16xf32>
    %73 = arith.addf %69, %72 : vector<4x16xf32>
    %74 = vector.broadcast %0 : f32 to vector<4x16xf32>
    %75 = arith.addf %73, %74 : vector<4x16xf32>
    %76 = arith.negf %75 : vector<4x16xf32>
    %77 = math.exp %76 : vector<4x16xf32>
    %cst_24 = arith.constant 1.000000e+00 : f32
    %78 = vector.broadcast %cst_24 : f32 to vector<4x16xf32>
    %79 = arith.addf %78, %77 : vector<4x16xf32>
    %80 = arith.divf %78, %79 : vector<4x16xf32>
    %81 = math.exp %80 : vector<4x16xf32>
    %82 = arith.mulf %11, %81 : vector<4x16xf32>
    %cst_25 = arith.constant dense<0.000000e+00> : vector<4xf32>
    %83 = vector.multi_reduction <add>, %82, %cst_25 [1] : vector<4x16xf32> to vector<4xf32>
    %84 = vector.shape_cast %83 : vector<4xf32> to vector<4x1xf32>
    %cst_26 = arith.constant 1.000000e-10 : f32
    %85 = vector.broadcast %cst_26 : f32 to vector<4x1xf32>
    %86 = arith.addf %84, %85 : vector<4x1xf32>
    %87 = arith.addf %11, %70 : vector<4x16xf32>
    %88 = arith.mulf %82, %87 : vector<4x16xf32>
    %89 = arith.truncf %88 : vector<4x16xf32> to vector<4x16xbf16>
    %c0_27 = arith.constant 0 : index
    %c0_28 = arith.constant 0 : index
    %90 = vector.load %arg4[%c0_27, %c0_28] : memref<16x1024xbf16, #tpu.memory_space<vmem>>, vector<16x1024xbf16>
    %cst_29 = arith.constant dense<0.000000e+00> : vector<4x1024xf32>
    %91 = tpu.matmul %89, %90, %cst_29 {dimension_numbers = #tpu.dot_dimension_numbers<[1], [0], [0], [1], [0, 0, 1, 1], [], []>} : vector<4x16xbf16>, vector<16x1024xbf16>, vector<4x1024xf32> -> vector<4x1024xf32>
    %cst_30 = arith.constant 1.000000e+00 : f32
    %92 = vector.broadcast %cst_30 : f32 to vector<4x1xf32>
    %93 = arith.divf %92, %86 : vector<4x1xf32>
    %94 = vector.broadcast %93 : vector<4x1xf32> to vector<4x16xf32>
    %95 = arith.mulf %82, %94 : vector<4x16xf32>
    %96 = vector.broadcast %93 : vector<4x1xf32> to vector<4x1024xf32>
    %97 = arith.mulf %91, %96 : vector<4x1024xf32>
    %98 = vector.broadcast %8 : vector<1x1024xf32> to vector<4x1024xf32>
    %99 = arith.addf %97, %98 : vector<4x1024xf32>
    %cst_31 = arith.constant 0.000000e+00 : f32
    %100 = vector.broadcast %cst_31 : f32 to vector<4x1024xf32>
    %101 = arith.cmpf ogt, %99, %100 : vector<4x1024xf32>
    %cst_32 = arith.constant 0.00999999977 : f32
    %102 = vector.broadcast %cst_32 : f32 to vector<4x1024xf32>
    %103 = arith.mulf %102, %99 : vector<4x1024xf32>
    %104 = arith.select %101, %99, %103 : vector<4x1024xi1>, vector<4x1024xf32>
    %105 = arith.truncf %104 : vector<4x1024xf32> to vector<4x1024xbf16>
    %c0_33 = arith.constant 0 : index
    %c0_34 = arith.constant 0 : index
    %106 = vector.load %arg5[%c0_33, %c0_34] : memref<1024x32xbf16, #tpu.memory_space<vmem>>, vector<1024x32xbf16>
    %cst_35 = arith.constant dense<0.000000e+00> : vector<4x32xf32>
    %107 = tpu.matmul %105, %106, %cst_35 {dimension_numbers = #tpu.dot_dimension_numbers<[1], [0], [0], [1], [0, 0, 1, 1], [], []>} : vector<4x1024xbf16>, vector<1024x32xbf16>, vector<4x32xf32> -> vector<4x32xf32>
    %108 = vector.broadcast %9 : vector<1x32xf32> to vector<4x32xf32>
    %109 = arith.addf %107, %108 : vector<4x32xf32>
    %cst_36 = arith.constant 0.000000e+00 : f32
    %110 = vector.broadcast %cst_36 : f32 to vector<4x32xf32>
    %111 = arith.cmpf ogt, %109, %110 : vector<4x32xf32>
    %cst_37 = arith.constant 0.00999999977 : f32
    %112 = vector.broadcast %cst_37 : f32 to vector<4x32xf32>
    %113 = arith.mulf %112, %109 : vector<4x32xf32>
    %114 = arith.select %111, %109, %113 : vector<4x32xi1>, vector<4x32xf32>
    %115 = arith.mulf %114, %114 : vector<4x32xf32>
    %cst_38 = arith.constant dense<0.000000e+00> : vector<4xf32>
    %116 = vector.multi_reduction <add>, %115, %cst_38 [1] : vector<4x32xf32> to vector<4xf32>
    %117 = vector.shape_cast %116 : vector<4xf32> to vector<4x1xf32>
    %cst_39 = arith.constant 1.000000e-24 : f32
    %118 = vector.broadcast %cst_39 : f32 to vector<4x1xf32>
    %119 = arith.maximumf %117, %118 : vector<4x1xf32>
    %120 = math.rsqrt %119 : vector<4x1xf32>
    %cst_40 = arith.constant 5.000000e-01 : f32
    %121 = vector.broadcast %cst_40 : f32 to vector<4x1xf32>
    %122 = arith.mulf %121, %119 : vector<4x1xf32>
    %123 = arith.mulf %122, %120 : vector<4x1xf32>
    %124 = arith.mulf %123, %120 : vector<4x1xf32>
    %cst_41 = arith.constant 1.500000e+00 : f32
    %125 = vector.broadcast %cst_41 : f32 to vector<4x1xf32>
    %126 = arith.subf %125, %124 : vector<4x1xf32>
    %127 = arith.mulf %120, %126 : vector<4x1xf32>
    %128 = vector.broadcast %127 : vector<4x1xf32> to vector<4x32xf32>
    %129 = arith.mulf %114, %128 : vector<4x32xf32>
    %130 = vector.broadcast %10 : vector<1x32xf32> to vector<4x32xf32>
    %131 = arith.mulf %129, %130 : vector<4x32xf32>
    %cst_42 = arith.constant dense<0.000000e+00> : vector<4xf32>
    %132 = vector.multi_reduction <add>, %131, %cst_42 [1] : vector<4x32xf32> to vector<4xf32>
    %133 = vector.shape_cast %132 : vector<4xf32> to vector<4x1xf32>
    %134 = vector.broadcast %2 : f32 to vector<4x1xf32>
    %135 = arith.addf %133, %134 : vector<4x1xf32>
    %c0_43 = arith.constant 0 : index
    %c0_44 = arith.constant 0 : index
    %136 = vector.load %arg7[%c0_43, %c0_44] : memref<4x384xf32, #tpu.memory_space<vmem>>, vector<4x1xf32>
    tpu.vector_store %arg7[%c0_43, %c0_44], %135 {strides = array<i32>} : memref<4x384xf32, #tpu.memory_space<vmem>>, vector<4x1xf32>,
    %c0_45 = arith.constant 0 : index
    %c128_46 = arith.constant 128 : index
    %137 = vector.load %arg7[%c0_45, %c128_46] : memref<4x384xf32, #tpu.memory_space<vmem>>, vector<4x16xf32>
    tpu.vector_store %arg7[%c0_45, %c128_46], %95 {strides = array<i32>} : memref<4x384xf32, #tpu.memory_space<vmem>>, vector<4x16xf32>,
    %c0_47 = arith.constant 0 : index
    %c256_48 = arith.constant 256 : index
    %138 = vector.load %arg7[%c0_47, %c256_48] : memref<4x384xf32, #tpu.memory_space<vmem>>, vector<4x32xf32>
    tpu.vector_store %arg7[%c0_47, %c256_48], %129 {strides = array<i32>} : memref<4x384xf32, #tpu.memory_space<vmem>>, vector<4x32xf32>,
    return
  }
}

</mosaic_0001>

<llo_original>
// kernel: ssin_forward.1
$region0: #{ssin_forward.1}
  #allocation0 [shape = 'u32[]', space=smem, size = 0x4, offset = 0x4, fixed_abs, tag = 'smem constant byte address 0x4 - core index']
  #allocation1 [shape = 'u32[144,128]{1,0:T(1,128)}', space=vmem, size = 0x12000, scoped, tag = 'internal scratch']
  %s0 = inlined_call_operand.vmem [shape: f32[3], index: 0, kind: input, shape index: {}]
  %s1 = inlined_call_operand.vmem [shape: f32[4,16], index: 1, kind: input, shape index: {}]
  %s2 = inlined_call_operand.vmem [shape: f32[16,8], index: 2, kind: input, shape index: {}]
  %s3 = inlined_call_operand.vmem [shape: bf16[264,128], index: 3, kind: input, shape index: {}]
  %s4 = inlined_call_operand.vmem [shape: bf16[16,1024], index: 4, kind: input, shape index: {}]
  %s5 = inlined_call_operand.vmem [shape: bf16[1024,32], index: 5, kind: input, shape index: {}]
  %s6 = inlined_call_operand.vmem [shape: f32[1,1536], index: 6, kind: input, shape index: {}]
  %s7 = inlined_call_operand.vmem [shape: f32[4,384], index: 7, kind: output, shape index: {}]
  %s8 = sld [smem:[#allocation0]]
  $region42: #{ssin_forward.1} parent=0
    _
  %s10 = ssub.s32 1, %s8
  %s11 = scalar_select 0, %s10, %s8
  $region1: #{ssin_forward.1} parent=0
    #allocation2 [shape = 'u8[512]{0}', space=smem, size = 0x200, scoped, tag = 'input window, operand 0, single buffered']
    #allocation3 [shape = 's32[1]{0}', space=sflag, size = 0x4, scoped, tag = 'scoped memory for ssin_forward.1']
    %12 = vsyncpa [#allocation3], 0
    // Predicated region
    $region2: #{ssin_forward.1} parent=1 // pred_check
      _
    $region3: #{ssin_forward.1} parent=1 // pred_check_branch
      %14 = sbr.rel (0) target = $region5
    $region4: #{ssin_forward.1} parent=1 // pred_region
      %s16 = ssub.s32 16, 16
      %17 = vsyncadd [#allocation3], %s16
      %s19 = sshll.u32 %s0, 4
      %s20 = int_to_ptr.vmem [resolvable:$true] %s19
      %22 = dma.vmem_to_smem %s20, 16, [#allocation2], [#allocation3]
    $region5: #{ssin_forward.1} parent=1 // pred_fallthru
      _
    // Predicated region
    $region6: #{ssin_forward.1} parent=1 // pred_check
      _
    $region7: #{ssin_forward.1} parent=1 // pred_check_branch
      %24 = sbr.rel (0) target = $region9
    $region8: #{ssin_forward.1} parent=1 // pred_region
      _
    $region9: #{ssin_forward.1} parent=1 // pred_fallthru
      _
    // Predicated region
    $region10: #{ssin_forward.1} parent=1 // pred_check
      _
    $region11: #{ssin_forward.1} parent=1 // pred_check_branch
      %26 = sbr.rel (0) target = $region13
    $region12: #{ssin_forward.1} parent=1 // pred_region
      _
    $region13: #{ssin_forward.1} parent=1 // pred_fallthru
      _
    // Predicated region
    $region14: #{ssin_forward.1} parent=1 // pred_check
      _
    $region15: #{ssin_forward.1} parent=1 // pred_check_branch
      %28 = sbr.rel (0) target = $region17
    $region16: #{ssin_forward.1} parent=1 // pred_region
      _
    $region17: #{ssin_forward.1} parent=1 // pred_fallthru
      _
    // Predicated region
    $region18: #{ssin_forward.1} parent=1 // pred_check
      _
    $region19: #{ssin_forward.1} parent=1 // pred_check_branch
      %30 = sbr.rel (0) target = $region21
    $region20: #{ssin_forward.1} parent=1 // pred_region
      _
    $region21: #{ssin_forward.1} parent=1 // pred_fallthru
      _
    // Predicated region
    $region22: #{ssin_forward.1} parent=1 // pred_check
      _
    $region23: #{ssin_forward.1} parent=1 // pred_check_branch
      %32 = sbr.rel (0) target = $region25
    $region24: #{ssin_forward.1} parent=1 // pred_region
      _
    $region25: #{ssin_forward.1} parent=1 // pred_fallthru
      _
    // Predicated region
    $region26: #{ssin_forward.1} parent=1 // pred_check
      _
    $region27: #{ssin_forward.1} parent=1 // pred_check_branch
      %34 = sbr.rel (0) target = $region29
    $region28: #{ssin_forward.1} parent=1 // pred_region
      _
    $region29: #{ssin_forward.1} parent=1 // pred_fallthru
      _
    // Predicated region
    $region30: #{ssin_forward.1} parent=1 // pred_check
      _
    $region31: #{ssin_forward.1} parent=1 // pred_check_branch
      %36 = sbr.rel (0) target = $region33
    $region32: #{ssin_forward.1} parent=1 // pred_region
      %37 = dma.done [#allocation3], 16
    $region33: #{ssin_forward.1} parent=1 // pred_fallthru
      _
    %38 = sfence
    %s40 = sld [smem:[#allocation2]]
    %s41 = sld [smem:[#allocation2 + $0x1]]
    %s42 = sld [smem:[#allocation2 + $0x2]]
    %v43 = vld [vmem:[%s3] sm:$0xf]
    %v44 = vld [vmem:[%s3 + $0x4] sm:$0xf]
    %v45 = vld [vmem:[%s3 + $0x8] sm:$0xf]
    %v46 = vld [vmem:[%s3 + $0xc] sm:$0xf]
    %v47 = vld [vmem:[%s3 + $0x10] sm:$0xf]
    %v48 = vld [vmem:[%s3 + $0x14] sm:$0xf]
    %v49 = vld [vmem:[%s3 + $0x18] sm:$0xf]
    %v50 = vld [vmem:[%s3 + $0x1c] sm:$0xf]
    %v51 = vld [vmem:[%s3 + $0x20] sm:$0xf]
    %v52 = vld [vmem:[%s3 + $0x24] sm:$0xf]
    %v53 = vld [vmem:[%s3 + $0x28] sm:$0xf]
    %v54 = vld [vmem:[%s3 + $0x2c] sm:$0xf]
    %v55 = vld [vmem:[%s3 + $0x30] sm:$0xf]
    %v56 = vld [vmem:[%s3 + $0x34] sm:$0xf]
    %v57 = vld [vmem:[%s3 + $0x38] sm:$0xf]
    %v58 = vld [vmem:[%s3 + $0x3c] sm:$0xf]
    %v59 = vld [vmem:[%s3 + $0x40] sm:$0xf]
    %v60 = vld [vmem:[%s3 + $0x44] sm:$0xf]
    %v61 = vld [vmem:[%s3 + $0x48] sm:$0xf]
    %v62 = vld [vmem:[%s3 + $0x4c] sm:$0xf]
    %v63 = vld [vmem:[%s3 + $0x50] sm:$0xf]
    %v64 = vld [vmem:[%s3 + $0x54] sm:$0xf]
    %v65 = vld [vmem:[%s3 + $0x58] sm:$0xf]
    %v66 = vld [vmem:[%s3 + $0x5c] sm:$0xf]
    %v67 = vld [vmem:[%s3 + $0x60] sm:$0xf]
    %v68 = vld [vmem:[%s3 + $0x64] sm:$0xf]
    %v69 = vld [vmem:[%s3 + $0x68] sm:$0xf]
    %v70 = vld [vmem:[%s3 + $0x6c] sm:$0xf]
    %v71 = vld [vmem:[%s3 + $0x70] sm:$0xf]
    %v72 = vld [vmem:[%s3 + $0x74] sm:$0xf]
    %v73 = vld [vmem:[%s3 + $0x78] sm:$0xf]
    %v74 = vld [vmem:[%s3 + $0x7c] sm:$0xf]
    %v75 = vld [vmem:[%s3 + $0x80] sm:$0xf]
    %v76 = vld [vmem:[%s6] sm:$0x1]
    %v77 = vld [vmem:[%s6 + $0x1] sm:$0x1]
    %v78 = vld [vmem:[%s6 + $0x2] sm:$0xff]
    %v79 = vld [vmem:[%s6 + $0xa] sm:$0x1]
    %v80 = vld [vmem:[%s6 + $0xb] sm:$0x1]
    %v81 = vld [vmem:[%s1] sm:$0xf]
    %v82 = vld [vmem:[%s2] sm:$0xff]
    %v83 = vld [vmem:[%s2 + $0x8] sm:$0xff]
    %v84 = vlaneseq
    %v85 = vshrl.u32 %v84, 7
    %v86 = vsub.s32 0, %v85
    %v87 = vrot.slane %v81, %v86
    %89 = vbcast.lane.b32.xlu0 %v87, 256
    %v90 = vpop.permute.xlu0 %89
    %s92 = sor.u32 256, 8
    %93 = vbcast.lane.b32.xlu0 %v87, %s92
    %v94 = vpop.permute.xlu0 %93
    %v95 = vlaneseq
    %v96 = vshrl.u32 %v95, 7
    %v97 = vsub.s32 1, %v96
    %v98 = vrot.slane %v81, %v97
    %100 = vbcast.lane.b32.xlu0 %v98, 256
    %v101 = vpop.permute.xlu0 %100
    %s103 = sor.u32 256, 8
    %104 = vbcast.lane.b32.xlu0 %v98, %s103
    %v105 = vpop.permute.xlu0 %104
    %v106 = vlaneseq
    %v107 = vshrl.u32 %v106, 7
    %v108 = vsub.s32 2, %v107
    %v109 = vrot.slane %v81, %v108
    %111 = vbcast.lane.b32.xlu0 %v109, 256
    %v112 = vpop.permute.xlu0 %111
    %s114 = sor.u32 256, 8
    %115 = vbcast.lane.b32.xlu0 %v109, %s114
    %v116 = vpop.permute.xlu0 %115
    %v117 = vlaneseq
    %v118 = vshrl.u32 %v117, 7
    %v119 = vsub.s32 3, %v118
    %v120 = vrot.slane %v81, %v119
    %122 = vbcast.lane.b32.xlu0 %v120, 256
    %v123 = vpop.permute.xlu0 %122
    %s125 = sor.u32 256, 8
    %126 = vbcast.lane.b32.xlu0 %v120, %s125
    %v127 = vpop.permute.xlu0 %126
    %v128 = vsub.f32 %v90, %v82
    %v129 = vsub.f32 %v94, %v83
    %v130 = vsub.f32 %v101, %v82
    %v131 = vsub.f32 %v105, %v83
    %v132 = vsub.f32 %v112, %v82
    %v133 = vsub.f32 %v116, %v83
    %v134 = vsub.f32 %v123, %v82
    %v135 = vsub.f32 %v127, %v83
    %v136 = vmul.f32 %v128, %v128
    %v137 = vmul.f32 %v129, %v129
    %v138 = vmul.f32 %v130, %v130
    %v139 = vmul.f32 %v131, %v131
    %v140 = vmul.f32 %v132, %v132
    %v141 = vmul.f32 %v133, %v133
    %v142 = vmul.f32 %v134, %v134
    %v143 = vmul.f32 %v135, %v135
    %v144 = vsub.f32 0.0, %v136
    %v145 = vsub.f32 0.0, %v137
    %v146 = vsub.f32 0.0, %v138
    %v147 = vsub.f32 0.0, %v139
    %v148 = vsub.f32 0.0, %v140
    %v149 = vsub.f32 0.0, %v141
    %v150 = vsub.f32 0.0, %v142
    %v151 = vsub.f32 0.0, %v143
    %v152 = vxor.u32 %v144, 2147483648
    %v153 = vxor.u32 %v145, 2147483648
    %v154 = vxor.u32 %v146, 2147483648
    %v155 = vxor.u32 %v147, 2147483648
    %v156 = vxor.u32 %v148, 2147483648
    %v157 = vxor.u32 %v149, 2147483648
    %v158 = vxor.u32 %v150, 2147483648
    %v159 = vxor.u32 %v151, 2147483648
    %v160 = vmul.f32 %v152, 1.442695
    %v161 = vpow.pop %v160
    %v162 = vmul.f32 %v153, 1.442695
    %v163 = vpow.pop %v162
    %v164 = vmul.f32 %v154, 1.442695
    %v165 = vpow.pop %v164
    %v166 = vmul.f32 %v155, 1.442695
    %v167 = vpow.pop %v166
    %v168 = vmul.f32 %v156, 1.442695
    %v169 = vpow.pop %v168
    %v170 = vmul.f32 %v157, 1.442695
    %v171 = vpow.pop %v170
    %v172 = vmul.f32 %v158, 1.442695
    %v173 = vpow.pop %v172
    %v174 = vmul.f32 %v159, 1.442695
    %v175 = vpow.pop %v174
    %v176 = vadd.f32 %v161, 1.0
    %v177 = vadd.f32 %v163, 1.0
    %v178 = vadd.f32 %v165, 1.0
    %v179 = vadd.f32 %v167, 1.0
    %v180 = vadd.f32 %v169, 1.0
    %v181 = vadd.f32 %v171, 1.0
    %v182 = vadd.f32 %v173, 1.0
    %v183 = vadd.f32 %v175, 1.0
    %v184 = vrcp.pop %v176
    %v185 = vmul.f32 1.0, %v184
    %v186 = vrcp.pop %v177
    %v187 = vmul.f32 1.0, %v186
    %v188 = vrcp.pop %v178
    %v189 = vmul.f32 1.0, %v188
    %v190 = vrcp.pop %v179
    %v191 = vmul.f32 1.0, %v190
    %v192 = vrcp.pop %v180
    %v193 = vmul.f32 1.0, %v192
    %v194 = vrcp.pop %v181
    %v195 = vmul.f32 1.0, %v194
    %v196 = vrcp.pop %v182
    %v197 = vmul.f32 1.0, %v196
    %v198 = vrcp.pop %v183
    %v199 = vmul.f32 1.0, %v198
    %v200 = vpack.c.bf16 %v187, %v185
    %v201 = vpack.c.bf16 %v191, %v189
    %v202 = vpack.c.bf16 %v195, %v193
    %v203 = vpack.c.bf16 %v199, %v197
    %v205 = vlaneseq
    %v206 = vshrl.u32 %v205, 7
    %v207 = vsub.s32 0, %v206
    %v208 = vrot.slane %v76, %v207
    %vm210 = vcmask 64512
    %v212 = vsel %vm210, %v200, 0
    %v215 = vsel %vm210, %v201, 0
    %v218 = vsel %vm210, %v202, 0
    %v221 = vsel %vm210, %v203, 0
    %vm223 = vcmask 1043456
    %v225 = vsel %vm223, %v43, 0
    %227 = vmatprep.subr.bf16.mxu0 0
    %228 = vmatpush1.bf16.msra.mxu0 %v225
    %229 = vmatprep.subr.bf16.mxu0 0
    %230 = vmatpush1.bf16.msra.mxu0 0
    %231 = vmatprep.subr.bf16.mxu0 0
    %232 = vmatpush1.bf16.msra.mxu0 0
    %233 = vmatprep.subr.bf16.mxu0 0
    %234 = vmatpush1.bf16.msra.mxu0 0
    %235 = vmatprep.subr.bf16.mxu0 0
    %236 = vmatpush1.bf16.msra.mxu0 0
    %237 = vmatprep.subr.bf16.mxu0 0
    %238 = vmatpush1.bf16.msra.mxu0 0
    %239 = vmatprep.subr.bf16.mxu0 0
    %240 = vmatpush1.bf16.msra.mxu0 0
    %241 = vmatprep.subr.bf16.mxu0 0
    %242 = vmatpush1.bf16.msra.mxu0 0
    %243 = vmatprep.subr.bf16.mxu0 0
    %244 = vmatpush1.bf16.msra.mxu0 0
    %245 = vmatprep.subr.bf16.mxu0 0
    %246 = vmatpush1.bf16.msra.mxu0 0
    %247 = vmatprep.subr.bf16.mxu0 0
    %248 = vmatpush1.bf16.msra.mxu0 0
    %249 = vmatprep.subr.bf16.mxu0 0
    %250 = vmatpush1.bf16.msra.mxu0 0
    %251 = vmatprep.subr.bf16.mxu0 0
    %252 = vmatpush1.bf16.msra.mxu0 0
    %253 = vmatprep.subr.bf16.mxu0 0
    %254 = vmatpush1.bf16.msra.mxu0 0
    %255 = vmatprep.subr.bf16.mxu0 0
    %256 = vmatpush1.bf16.msra.mxu0 0
    %257 = vmatprep.subr.bf16.mxu0 0
    %258 = vmatpush1.bf16.msra.mxu0 0
    %259 = vmatprep.mubr.bf16.mxu0 0
    %260 = vmatmul.mubr.bf16.gmra.mrb[0].mxu0 %v212
    %v261 = vpop.f32.mrb[0].mxu0
    %v262 = vadd.f32 %v208, %v261
    %v263 = vpop.f32.mrb[0].mxu0
    %v264 = vpop.f32.mrb[0].mxu0
    %v265 = vadd.f32 %v208, %v264
    %v266 = vpop.f32.mrb[0].mxu0
    %267 = vmatprep.mubr.bf16.mxu0 0
    %268 = vmatmul.mubr.bf16.gmra.mrb[0].mxu0 %v215
    %v269 = vpop.f32.mrb[0].mxu0
    %v270 = vadd.f32 %v208, %v269
    %v271 = vpop.f32.mrb[0].mxu0
    %v272 = vpop.f32.mrb[0].mxu0
    %v273 = vadd.f32 %v208, %v272
    %v274 = vpop.f32.mrb[0].mxu0
    %275 = vmatprep.mubr.bf16.mxu0 0
    %276 = vmatmul.mubr.bf16.gmra.mrb[0].mxu0 %v218
    %v277 = vpop.f32.mrb[0].mxu0
    %v278 = vadd.f32 %v208, %v277
    %v279 = vpop.f32.mrb[0].mxu0
    %v280 = vpop.f32.mrb[0].mxu0
    %v281 = vadd.f32 %v208, %v280
    %v282 = vpop.f32.mrb[0].mxu0
    %283 = vmatprep.mubr.bf16.mxu0 0
    %284 = vmatmul.mubr.bf16.gmra.mrb[0].mxu0 %v221
    %v285 = vpop.f32.mrb[0].mxu0
    %v286 = vadd.f32 %v208, %v285
    %v287 = vpop.f32.mrb[0].mxu0
    %v288 = vpop.f32.mrb[0].mxu0
    %v289 = vadd.f32 %v208, %v288
    %v290 = vpop.f32.mrb[0].mxu0
    %291 = vdwg.mxu0
    %v292 = vmax.f32 %v262, 0.0
    %v293 = vmax.f32 %v265, 0.0
    %v294 = vmax.f32 %v270, 0.0
    %v295 = vmax.f32 %v273, 0.0
    %v296 = vmax.f32 %v278, 0.0
    %v297 = vmax.f32 %v281, 0.0
    %v298 = vmax.f32 %v286, 0.0
    %v299 = vmax.f32 %v289, 0.0
    %v300 = vpack.c.bf16 %v293, %v292
    %v301 = vpack.c.bf16 %v295, %v294
    %v302 = vpack.c.bf16 %v297, %v296
    %v303 = vpack.c.bf16 %v299, %v298
    %v305 = vlaneseq
    %v306 = vshrl.u32 %v305, 7
    %v307 = vsub.s32 0, %v306
    %v308 = vrot.slane %v77, %v307
    %v326 = vunpack.c.l.b16 %v44
    %v327 = vunpack.c.l.b16 %v45
    %v328 = vunpack.c.l.b16 %v46
    %v329 = vunpack.c.l.b16 %v47
    %v330 = vunpack.c.l.b16 %v48
    %v331 = vunpack.c.l.b16 %v49
    %v332 = vunpack.c.l.b16 %v50
    %v333 = vunpack.c.l.b16 %v51
    %v334 = vunpack.c.l.b16 %v52
    %v335 = vunpack.c.l.b16 %v53
    %v336 = vunpack.c.l.b16 %v54
    %v337 = vunpack.c.l.b16 %v55
    %v338 = vunpack.c.l.b16 %v56
    %v339 = vunpack.c.l.b16 %v57
    %v340 = vunpack.c.l.b16 %v58
    %v341 = vunpack.c.l.b16 %v59
    %v342 = vpack.c.b16 %v327, %v326
    %v343 = vpack.c.b16 %v329, %v328
    %v344 = vpack.c.b16 %v331, %v330
    %v345 = vpack.c.b16 %v333, %v332
    %v346 = vpack.c.b16 %v335, %v334
    %v347 = vpack.c.b16 %v337, %v336
    %v348 = vpack.c.b16 %v339, %v338
    %v349 = vpack.c.b16 %v341, %v340
    %358 = vmatprep.subr.bf16.mxu0 0
    %359 = vmatpush1.bf16.msra.mxu0 %v342
    %360 = vmatprep.subr.bf16.mxu0 0
    %361 = vmatpush1.bf16.msra.mxu0 %v343
    %362 = vmatprep.subr.bf16.mxu0 0
    %363 = vmatpush1.bf16.msra.mxu0 %v344
    %364 = vmatprep.subr.bf16.mxu0 0
    %365 = vmatpush1.bf16.msra.mxu0 %v345
    %366 = vmatprep.subr.bf16.mxu0 0
    %367 = vmatpush1.bf16.msra.mxu0 %v346
    %368 = vmatprep.subr.bf16.mxu0 0
    %369 = vmatpush1.bf16.msra.mxu0 %v347
    %370 = vmatprep.subr.bf16.mxu0 0
    %371 = vmatpush1.bf16.msra.mxu0 %v348
    %372 = vmatprep.subr.bf16.mxu0 0
    %373 = vmatpush1.bf16.msra.mxu0 %v349
    %374 = vmatprep.subr.bf16.mxu0 0
    %375 = vmatpush1.bf16.msra.mxu0 0
    %376 = vmatprep.subr.bf16.mxu0 0
    %377 = vmatpush1.bf16.msra.mxu0 0
    %378 = vmatprep.subr.bf16.mxu0 0
    %379 = vmatpush1.bf16.msra.mxu0 0
    %380 = vmatprep.subr.bf16.mxu0 0
    %381 = vmatpush1.bf16.msra.mxu0 0
    %382 = vmatprep.subr.bf16.mxu0 0
    %383 = vmatpush1.bf16.msra.mxu0 0
    %384 = vmatprep.subr.bf16.mxu0 0
    %385 = vmatpush1.bf16.msra.mxu0 0
    %386 = vmatprep.subr.bf16.mxu0 0
    %387 = vmatpush1.bf16.msra.mxu0 0
    %388 = vmatprep.subr.bf16.mxu0 0
    %389 = vmatpush1.bf16.msra.mxu0 0
    %390 = vmatprep.mubr.bf16.mxu0 0
    %391 = vmatmul.mubr.bf16.gmra.mrb[0].mxu0 %v300
    %v392 = vpop.f32.mrb[0].mxu0
    %v393 = vadd.f32 %v308, %v392
    %v394 = vpop.f32.mrb[0].mxu0
    %v395 = vpop.f32.mrb[0].mxu0
    %v396 = vadd.f32 %v308, %v395
    %v397 = vpop.f32.mrb[0].mxu0
    %398 = vmatprep.mubr.bf16.mxu0 0
    %399 = vmatmul.mubr.bf16.gmra.mrb[0].mxu0 %v301
    %v400 = vpop.f32.mrb[0].mxu0
    %v401 = vadd.f32 %v308, %v400
    %v402 = vpop.f32.mrb[0].mxu0
    %v403 = vpop.f32.mrb[0].mxu0
    %v404 = vadd.f32 %v308, %v403
    %v405 = vpop.f32.mrb[0].mxu0
    %406 = vmatprep.mubr.bf16.mxu0 0
    %407 = vmatmul.mubr.bf16.gmra.mrb[0].mxu0 %v302
    %v408 = vpop.f32.mrb[0].mxu0
    %v409 = vadd.f32 %v308, %v408
    %v410 = vpop.f32.mrb[0].mxu0
    %v411 = vpop.f32.mrb[0].mxu0
    %v412 = vadd.f32 %v308, %v411
    %v413 = vpop.f32.mrb[0].mxu0
    %414 = vmatprep.mubr.bf16.mxu0 0
    %415 = vmatmul.mubr.bf16.gmra.mrb[0].mxu0 %v303
    %v416 = vpop.f32.mrb[0].mxu0
    %v417 = vadd.f32 %v308, %v416
    %v418 = vpop.f32.mrb[0].mxu0
    %v419 = vpop.f32.mrb[0].mxu0
    %v420 = vadd.f32 %v308, %v419
    %v421 = vpop.f32.mrb[0].mxu0
    %422 = vdwg.mxu0
    %v423 = vmax.f32 %v393, 0.0
    %v424 = vmax.f32 %v396, 0.0
    %v425 = vmax.f32 %v401, 0.0
    %v426 = vmax.f32 %v404, 0.0
    %v427 = vmax.f32 %v409, 0.0
    %v428 = vmax.f32 %v412, 0.0
    %v429 = vmax.f32 %v417, 0.0
    %v430 = vmax.f32 %v420, 0.0
    %v431 = vpack.c.bf16 %v424, %v423
    %v432 = vpack.c.bf16 %v426, %v425
    %v433 = vpack.c.bf16 %v428, %v427
    %v434 = vpack.c.bf16 %v430, %v429
    %v451 = vunpack.c.l.b16 %v60
    %v452 = vunpack.c.l.b16 %v61
    %v453 = vunpack.c.l.b16 %v62
    %v454 = vunpack.c.l.b16 %v63
    %v455 = vunpack.c.l.b16 %v64
    %v456 = vunpack.c.l.b16 %v65
    %v457 = vunpack.c.l.b16 %v66
    %v458 = vunpack.c.l.b16 %v67
    %v459 = vunpack.c.l.b16 %v68
    %v460 = vunpack.c.l.b16 %v69
    %v461 = vunpack.c.l.b16 %v70
    %v462 = vunpack.c.l.b16 %v71
    %v463 = vunpack.c.l.b16 %v72
    %v464 = vunpack.c.l.b16 %v73
    %v465 = vunpack.c.l.b16 %v74
    %v466 = vunpack.c.l.b16 %v75
    %v467 = vpack.c.b16 %v452, %v451
    %v468 = vpack.c.b16 %v454, %v453
    %v469 = vpack.c.b16 %v456, %v455
    %v470 = vpack.c.b16 %v458, %v457
    %v471 = vpack.c.b16 %v460, %v459
    %v472 = vpack.c.b16 %v462, %v461
    %v473 = vpack.c.b16 %v464, %v463
    %v474 = vpack.c.b16 %v466, %v465
    %483 = vmatprep.subr.bf16.mxu0 0
    %484 = vmatpush1.bf16.msra.mxu0 %v467
    %485 = vmatprep.subr.bf16.mxu0 0
    %486 = vmatpush1.bf16.msra.mxu0 %v468
    %487 = vmatprep.subr.bf16.mxu0 0
    %488 = vmatpush1.bf16.msra.mxu0 %v469
    %489 = vmatprep.subr.bf16.mxu0 0
    %490 = vmatpush1.bf16.msra.mxu0 %v470
    %491 = vmatprep.subr.bf16.mxu0 0
    %492 = vmatpush1.bf16.msra.mxu0 %v471
    %493 = vmatprep.subr.bf16.mxu0 0
    %494 = vmatpush1.bf16.msra.mxu0 %v472
    %495 = vmatprep.subr.bf16.mxu0 0
    %496 = vmatpush1.bf16.msra.mxu0 %v473
    %497 = vmatprep.subr.bf16.mxu0 0
    %498 = vmatpush1.bf16.msra.mxu0 %v474
    %499 = vmatprep.subr.bf16.mxu0 0
    %500 = vmatpush1.bf16.msra.mxu0 0
    %501 = vmatprep.subr.bf16.mxu0 0
    %502 = vmatpush1.bf16.msra.mxu0 0
    %503 = vmatprep.subr.bf16.mxu0 0
    %504 = vmatpush1.bf16.msra.mxu0 0
    %505 = vmatprep.subr.bf16.mxu0 0
    %506 = vmatpush1.bf16.msra.mxu0 0
    %507 = vmatprep.subr.bf16.mxu0 0
    %508 = vmatpush1.bf16.msra.mxu0 0
    %509 = vmatprep.subr.bf16.mxu0 0
    %510 = vmatpush1.bf16.msra.mxu0 0
    %511 = vmatprep.subr.bf16.mxu0 0
    %512 = vmatpush1.bf16.msra.mxu0 0
    %513 = vmatprep.subr.bf16.mxu0 0
    %514 = vmatpush1.bf16.msra.mxu0 0
    %515 = vmatprep.mubr.bf16.mxu0 0
    %516 = vmatmul.mubr.bf16.gmra.mrb[0].mxu0 %v431
    %v517 = vpop.f32.mrb[0].mxu0
    %v518 = vadd.f32 0.0, %v517
    %v519 = vpop.f32.mrb[0].mxu0
    %v520 = vpop.f32.mrb[0].mxu0
    %v521 = vadd.f32 0.0, %v520
    %v522 = vpop.f32.mrb[0].mxu0
    %523 = vmatprep.mubr.bf16.mxu0 0
    %524 = vmatmul.mubr.bf16.gmra.mrb[0].mxu0 %v432
    %v525 = vpop.f32.mrb[0].mxu0
    %v526 = vadd.f32 0.0, %v525
    %v527 = vpop.f32.mrb[0].mxu0
    %v528 = vpop.f32.mrb[0].mxu0
    %v529 = vadd.f32 0.0, %v528
    %v530 = vpop.f32.mrb[0].mxu0
    %531 = vmatprep.mubr.bf16.mxu0 0
    %532 = vmatmul.mubr.bf16.gmra.mrb[0].mxu0 %v433
    %v533 = vpop.f32.mrb[0].mxu0
    %v534 = vadd.f32 0.0, %v533
    %v535 = vpop.f32.mrb[0].mxu0
    %v536 = vpop.f32.mrb[0].mxu0
    %v537 = vadd.f32 0.0, %v536
    %v538 = vpop.f32.mrb[0].mxu0
    %539 = vmatprep.mubr.bf16.mxu0 0
    %540 = vmatmul.mubr.bf16.gmra.mrb[0].mxu0 %v434
    %v541 = vpop.f32.mrb[0].mxu0
    %v542 = vadd.f32 0.0, %v541
    %v543 = vpop.f32.mrb[0].mxu0
    %v544 = vpop.f32.mrb[0].mxu0
    %v545 = vadd.f32 0.0, %v544
    %v546 = vpop.f32.mrb[0].mxu0
    %547 = vdwg.mxu0
    %v548 = vlaneseq
    %v549 = vshrl.u32 %v548, 7
    %v550 = vadd.s32 %v549, 8
    %v551 = vlaneseq
    %v552 = vand.u32 %v551, 127
    %vm553 = vcmp.eq.s32.totalorder %v549, %v552
    %vm554 = vcmp.eq.s32.totalorder %v550, %v552
    %v555 = vsel %vm553, 1, 0
    %v556 = vsel %vm554, 1, 0
    %v557 = vcvt.s32.f32 %v555
    %v558 = vcvt.s32.f32 %v556
    %v559 = vmul.u32 %v549, 16
    %vm560 = vcmp.ge.s32.totalorder %v552, %v559
    %v561 = vadd.s32 %v549, 1
    %v562 = vmul.u32 %v561, 16
    %vm563 = vcmp.lt.s32.totalorder %v552, %v562
    %vm564 = vmand %vm560, %vm563
    %v565 = vsel %vm564, 1.0, 0.0
    %567 = vset.pattern.permute.xlu0 0
    %568 = vperm.xlu0 %567, %v518
    %v569 = vpop.permute.xlu0 %568
    %572 = vset.pattern.permute.xlu0 0
    %573 = vperm.xlu0 %572, %v521
    %v574 = vpop.permute.xlu0 %573
    %577 = vset.pattern.permute.xlu0 0
    %578 = vperm.xlu0 %577, %v526
    %v579 = vpop.permute.xlu0 %578
    %582 = vset.pattern.permute.xlu0 0
    %583 = vperm.xlu0 %582, %v529
    %v584 = vpop.permute.xlu0 %583
    %587 = vset.pattern.permute.xlu0 0
    %588 = vperm.xlu0 %587, %v534
    %v589 = vpop.permute.xlu0 %588
    %592 = vset.pattern.permute.xlu0 0
    %593 = vperm.xlu0 %592, %v537
    %v594 = vpop.permute.xlu0 %593
    %597 = vset.pattern.permute.xlu0 0
    %598 = vperm.xlu0 %597, %v542
    %v599 = vpop.permute.xlu0 %598
    %602 = vset.pattern.permute.xlu0 0
    %603 = vperm.xlu0 %602, %v545
    %v604 = vpop.permute.xlu0 %603
    %v606 = vmul.f32 %v569, %v557
    %v607 = vmul.f32 %v574, %v558
    %v608 = vmul.f32 %v579, %v557
    %v609 = vmul.f32 %v584, %v558
    %v610 = vmul.f32 %v589, %v557
    %v611 = vmul.f32 %v594, %v558
    %v612 = vmul.f32 %v599, %v557
    %v613 = vmul.f32 %v604, %v558
    %614 = vset.pattern.permute.xlu0 1
    %615 = vperm.xlu0 %614, %v518
    %v616 = vpop.permute.xlu0 %615
    %618 = vset.pattern.permute.xlu0 1
    %619 = vperm.xlu0 %618, %v521
    %v620 = vpop.permute.xlu0 %619
    %622 = vset.pattern.permute.xlu0 1
    %623 = vperm.xlu0 %622, %v526
    %v624 = vpop.permute.xlu0 %623
    %626 = vset.pattern.permute.xlu0 1
    %627 = vperm.xlu0 %626, %v529
    %v628 = vpop.permute.xlu0 %627
    %630 = vset.pattern.permute.xlu0 1
    %631 = vperm.xlu0 %630, %v534
    %v632 = vpop.permute.xlu0 %631
    %634 = vset.pattern.permute.xlu0 1
    %635 = vperm.xlu0 %634, %v537
    %v636 = vpop.permute.xlu0 %635
    %638 = vset.pattern.permute.xlu0 1
    %639 = vperm.xlu0 %638, %v542
    %v640 = vpop.permute.xlu0 %639
    %642 = vset.pattern.permute.xlu0 1
    %643 = vperm.xlu0 %642, %v545
    %v644 = vpop.permute.xlu0 %643
    %v646 = vmul.f32 %v616, %v557
    %v647 = vmul.f32 %v620, %v558
    %v648 = vmul.f32 %v624, %v557
    %v649 = vmul.f32 %v628, %v558
    %v650 = vmul.f32 %v632, %v557
    %v651 = vmul.f32 %v636, %v558
    %v652 = vmul.f32 %v640, %v557
    %v653 = vmul.f32 %v644, %v558
    %662 = vrot.lane.b32.xlu0 %v646, 16
    %v663 = vpop.permute.xlu0 %662
    %664 = vrot.lane.b32.xlu0 %v647, 16
    %v665 = vpop.permute.xlu0 %664
    %666 = vrot.lane.b32.xlu0 %v648, 16
    %v667 = vpop.permute.xlu0 %666
    %668 = vrot.lane.b32.xlu0 %v649, 16
    %v669 = vpop.permute.xlu0 %668
    %670 = vrot.lane.b32.xlu0 %v650, 16
    %v671 = vpop.permute.xlu0 %670
    %672 = vrot.lane.b32.xlu0 %v651, 16
    %v673 = vpop.permute.xlu0 %672
    %674 = vrot.lane.b32.xlu0 %v652, 16
    %v675 = vpop.permute.xlu0 %674
    %676 = vrot.lane.b32.xlu0 %v653, 16
    %v677 = vpop.permute.xlu0 %676
    %vm686 = vcmask 130048
    %v687 = vsel %vm686, %v606, %v663
    %v688 = vsel %vm686, %v607, %v665
    %v689 = vsel %vm686, %v608, %v667
    %v690 = vsel %vm686, %v609, %v669
    %v691 = vsel %vm686, %v610, %v671
    %v692 = vsel %vm686, %v611, %v673
    %v693 = vsel %vm686, %v612, %v675
    %v694 = vsel %vm686, %v613, %v677
    %vm695 = vcmask 523264
    %v697 = vsel %vm695, %v565, 0
    %699 = vmatprep.subr.mxu0 0.0
    %700 = vmatpush1.msra.mxu0 %v687
    %701 = vmatprep.subr.mxu0 0.0
    %702 = vmatpush1.msra.mxu0 %v688
    %703 = vmatprep.subr.mxu0 0.0
    %704 = vmatpush1.msra.mxu0 %v689
    %705 = vmatprep.subr.mxu0 0.0
    %706 = vmatpush1.msra.mxu0 %v690
    %707 = vmatprep.subr.mxu0 0.0
    %708 = vmatpush1.msra.mxu0 %v691
    %709 = vmatprep.subr.mxu0 0.0
    %710 = vmatpush1.msra.mxu0 %v692
    %711 = vmatprep.subr.mxu0 0.0
    %712 = vmatpush1.msra.mxu0 %v693
    %713 = vmatprep.subr.mxu0 0.0
    %714 = vmatpush1.msra.mxu0 %v694
    %715 = vmatprep.subr.mxu0 0.0
    %716 = vmatpush1.msra.mxu0 0.0
    %717 = vmatprep.subr.mxu0 0.0
    %718 = vmatpush1.msra.mxu0 0.0
    %719 = vmatprep.subr.mxu0 0.0
    %720 = vmatpush1.msra.mxu0 0.0
    %721 = vmatprep.subr.mxu0 0.0
    %722 = vmatpush1.msra.mxu0 0.0
    %723 = vmatprep.subr.mxu0 0.0
    %724 = vmatpush1.msra.mxu0 0.0
    %725 = vmatprep.subr.mxu0 0.0
    %726 = vmatpush1.msra.mxu0 0.0
    %727 = vmatprep.subr.mxu0 0.0
    %728 = vmatpush1.msra.mxu0 0.0
    %729 = vmatprep.subr.mxu0 0.0
    %730 = vmatpush1.msra.mxu0 0.0
    %731 = vmatprep.subr.mxu0 0.0
    %732 = vmatpush1.msra.mxu0 0.0
    %733 = vmatprep.subr.mxu0 0.0
    %734 = vmatpush1.msra.mxu0 0.0
    %735 = vmatprep.subr.mxu0 0.0
    %736 = vmatpush1.msra.mxu0 0.0
    %737 = vmatprep.subr.mxu0 0.0
    %738 = vmatpush1.msra.mxu0 0.0
    %739 = vmatprep.subr.mxu0 0.0
    %740 = vmatpush1.msra.mxu0 0.0
    %741 = vmatprep.subr.mxu0 0.0
    %742 = vmatpush1.msra.mxu0 0.0
    %743 = vmatprep.subr.mxu0 0.0
    %744 = vmatpush1.msra.mxu0 0.0
    %745 = vmatprep.subr.mxu0 0.0
    %746 = vmatpush1.msra.mxu0 0.0
    %747 = vmatprep.subr.mxu0 0.0
    %748 = vmatpush1.msra.mxu0 0.0
    %749 = vmatprep.subr.mxu0 0.0
    %750 = vmatpush1.msra.mxu0 0.0
    %751 = vmatprep.subr.mxu0 0.0
    %752 = vmatpush1.msra.mxu0 0.0
    %753 = vmatprep.subr.mxu0 0.0
    %754 = vmatpush1.msra.mxu0 0.0
    %755 = vmatprep.subr.mxu0 0.0
    %756 = vmatpush1.msra.mxu0 0.0
    %757 = vmatprep.subr.mxu0 0.0
    %758 = vmatpush1.msra.mxu0 0.0
    %759 = vmatprep.subr.mxu0 0.0
    %760 = vmatpush1.msra.mxu0 0.0
    %761 = vmatprep.subr.mxu0 0.0
    %762 = vmatpush1.msra.mxu0 0.0
    %763 = vmatprep.mubr.f32.mxu0 0.0
    %764 = vmatmul.mubr.f32.gmra.mrb[0].mxu0 %v697
    %v765 = vpop.f32.mrb[0].mxu0
    %v766 = vadd.f32 0.0, %v765
    %v767 = vpop.f32.mrb[0].mxu0
    %768 = vdwg.mxu0
    %v769 = vstv %s41
    %v770 = vmul.f32 %v769, %v81
    %v771 = vadd.f32 %v766, %v770
    %v772 = vstv %s40
    %v773 = vadd.f32 %v771, %v772
    %v774 = vxor.u32 %v773, 2147483648
    %v775 = vmul.f32 %v774, 1.442695
    %v776 = vpow.pop %v775
    %v777 = vadd.f32 %v776, 1.0
    %v778 = vrcp.pop %v777
    %v779 = vmul.f32 1.0, %v778
    %v780 = vmul.f32 %v779, 1.442695
    %v781 = vpow.pop %v780
    %v782 = vmul.f32 %v81, %v781
    %vm783 = vcmask 125952
    %v784 = vsel %vm783, %v782, 0.0
    %785 = vadd.xlane.f32.xlu0 %v784
    %v786 = vpop.xlane.xlu0 %785
    %v787 = vadd.f32 %v786, 1e-10
    %789 = vrot.lane.b32.xlu0 %v766, 112
    %v790 = vpop.permute.xlu0 %789
    %v792 = vadd.f32 %v81, %v790
    %v793 = vmul.f32 %v782, %v792
    %v794 = vpack.c.bf16 %v793, %v793
    %v795 = vld [vmem:[%s4] sm:$0xff]
    %v796 = vld [vmem:[%s4 + $0x8] sm:$0xff]
    %v797 = vld [vmem:[%s4 + $0x10] sm:$0xff]
    %v798 = vld [vmem:[%s4 + $0x18] sm:$0xff]
    %v799 = vld [vmem:[%s4 + $0x20] sm:$0xff]
    %v800 = vld [vmem:[%s4 + $0x28] sm:$0xff]
    %v801 = vld [vmem:[%s4 + $0x30] sm:$0xff]
    %v802 = vld [vmem:[%s4 + $0x38] sm:$0xff]
    %v811 = vunpack.c.l.b16 %v795
    %v812 = vunpack.c.h.b16 %v795
    %v813 = vunpack.c.l.b16 %v796
    %v814 = vunpack.c.h.b16 %v796
    %v815 = vunpack.c.l.b16 %v797
    %v816 = vunpack.c.h.b16 %v797
    %v817 = vunpack.c.l.b16 %v798
    %v818 = vunpack.c.h.b16 %v798
    %v819 = vunpack.c.l.b16 %v799
    %v820 = vunpack.c.h.b16 %v799
    %v821 = vunpack.c.l.b16 %v800
    %v822 = vunpack.c.h.b16 %v800
    %v823 = vunpack.c.l.b16 %v801
    %v824 = vunpack.c.h.b16 %v801
    %v825 = vunpack.c.l.b16 %v802
    %v826 = vunpack.c.h.b16 %v802
    %v827 = vpack.c.b16 %v819, %v811
    %v828 = vpack.c.b16 %v820, %v812
    %v829 = vpack.c.b16 %v821, %v813
    %v830 = vpack.c.b16 %v822, %v814
    %v831 = vpack.c.b16 %v823, %v815
    %v832 = vpack.c.b16 %v824, %v816
    %v833 = vpack.c.b16 %v825, %v817
    %v834 = vpack.c.b16 %v826, %v818
    %v844 = vsel %vm686, %v794, 0
    %846 = vmatprep.subr.bf16.mxu0 %v828
    %847 = vmatpush1.bf16.msra.mxu0 %v827
    %848 = vmatprep.subr.bf16.mxu0 0
    %849 = vmatpush1.bf16.msra.mxu0 0
    %850 = vmatprep.subr.bf16.mxu0 0
    %851 = vmatpush1.bf16.msra.mxu0 0
    %852 = vmatprep.subr.bf16.mxu0 0
    %853 = vmatpush1.bf16.msra.mxu0 0
    %854 = vmatprep.subr.bf16.mxu0 0
    %855 = vmatpush1.bf16.msra.mxu0 0
    %856 = vmatprep.subr.bf16.mxu0 0
    %857 = vmatpush1.bf16.msra.mxu0 0
    %858 = vmatprep.subr.bf16.mxu0 0
    %859 = vmatpush1.bf16.msra.mxu0 0
    %860 = vmatprep.subr.bf16.mxu0 0
    %861 = vmatpush1.bf16.msra.mxu0 0
    %862 = vmatprep.subr.bf16.mxu0 0
    %863 = vmatpush1.bf16.msra.mxu0 0
    %864 = vmatprep.subr.bf16.mxu0 0
    %865 = vmatpush1.bf16.msra.mxu0 0
    %866 = vmatprep.subr.bf16.mxu0 0
    %867 = vmatpush1.bf16.msra.mxu0 0
    %868 = vmatprep.subr.bf16.mxu0 0
    %869 = vmatpush1.bf16.msra.mxu0 0
    %870 = vmatprep.subr.bf16.mxu0 0
    %871 = vmatpush1.bf16.msra.mxu0 0
    %872 = vmatprep.subr.bf16.mxu0 0
    %873 = vmatpush1.bf16.msra.mxu0 0
    %874 = vmatprep.subr.bf16.mxu0 0
    %875 = vmatpush1.bf16.msra.mxu0 0
    %876 = vmatprep.subr.bf16.mxu0 0
    %877 = vmatpush1.bf16.msra.mxu0 0
    %878 = vmatprep.mubr.bf16.mxu0 0
    %879 = vmatmul.mubr.bf16.gmra.mrb[0].mxu0 %v844
    %v880 = vpop.f32.mrb[0].mxu0
    %v881 = vadd.f32 0.0, %v880
    %v882 = vpop.f32.mrb[0].mxu0
    %v883 = vadd.f32 0.0, %v882
    %v884 = vpop.f32.mrb[0].mxu0
    %v885 = vpop.f32.mrb[0].mxu0
    %886 = vdwg.mxu0
    %887 = vmatprep.subr.bf16.mxu0 %v830
    %888 = vmatpush1.bf16.msra.mxu0 %v829
    %889 = vmatprep.subr.bf16.mxu0 0
    %890 = vmatpush1.bf16.msra.mxu0 0
    %891 = vmatprep.subr.bf16.mxu0 0
    %892 = vmatpush1.bf16.msra.mxu0 0
    %893 = vmatprep.subr.bf16.mxu0 0
    %894 = vmatpush1.bf16.msra.mxu0 0
    %895 = vmatprep.subr.bf16.mxu0 0
    %896 = vmatpush1.bf16.msra.mxu0 0
    %897 = vmatprep.subr.bf16.mxu0 0
    %898 = vmatpush1.bf16.msra.mxu0 0
    %899 = vmatprep.subr.bf16.mxu0 0
    %900 = vmatpush1.bf16.msra.mxu0 0
    %901 = vmatprep.subr.bf16.mxu0 0
    %902 = vmatpush1.bf16.msra.mxu0 0
    %903 = vmatprep.subr.bf16.mxu0 0
    %904 = vmatpush1.bf16.msra.mxu0 0
    %905 = vmatprep.subr.bf16.mxu0 0
    %906 = vmatpush1.bf16.msra.mxu0 0
    %907 = vmatprep.subr.bf16.mxu0 0
    %908 = vmatpush1.bf16.msra.mxu0 0
    %909 = vmatprep.subr.bf16.mxu0 0
    %910 = vmatpush1.bf16.msra.mxu0 0
    %911 = vmatprep.subr.bf16.mxu0 0
    %912 = vmatpush1.bf16.msra.mxu0 0
    %913 = vmatprep.subr.bf16.mxu0 0
    %914 = vmatpush1.bf16.msra.mxu0 0
    %915 = vmatprep.subr.bf16.mxu0 0
    %916 = vmatpush1.bf16.msra.mxu0 0
    %917 = vmatprep.subr.bf16.mxu0 0
    %918 = vmatpush1.bf16.msra.mxu0 0
    %919 = vmatprep.mubr.bf16.mxu0 0
    %920 = vmatmul.mubr.bf16.gmra.mrb[0].mxu0 %v844
    %v921 = vpop.f32.mrb[0].mxu0
    %v922 = vadd.f32 0.0, %v921
    %v923 = vpop.f32.mrb[0].mxu0
    %v924 = vadd.f32 0.0, %v923
    %v925 = vpop.f32.mrb[0].mxu0
    %v926 = vpop.f32.mrb[0].mxu0
    %927 = vdwg.mxu0
    %928 = vmatprep.subr.bf16.mxu0 %v832
    %929 = vmatpush1.bf16.msra.mxu0 %v831
    %930 = vmatprep.subr.bf16.mxu0 0
    %931 = vmatpush1.bf16.msra.mxu0 0
    %932 = vmatprep.subr.bf16.mxu0 0
    %933 = vmatpush1.bf16.msra.mxu0 0
    %934 = vmatprep.subr.bf16.mxu0 0
    %935 = vmatpush1.bf16.msra.mxu0 0
    %936 = vmatprep.subr.bf16.mxu0 0
    %937 = vmatpush1.bf16.msra.mxu0 0
    %938 = vmatprep.subr.bf16.mxu0 0
    %939 = vmatpush1.bf16.msra.mxu0 0
    %940 = vmatprep.subr.bf16.mxu0 0
    %941 = vmatpush1.bf16.msra.mxu0 0
    %942 = vmatprep.subr.bf16.mxu0 0
    %943 = vmatpush1.bf16.msra.mxu0 0
    %944 = vmatprep.subr.bf16.mxu0 0
    %945 = vmatpush1.bf16.msra.mxu0 0
    %946 = vmatprep.subr.bf16.mxu0 0
    %947 = vmatpush1.bf16.msra.mxu0 0
    %948 = vmatprep.subr.bf16.mxu0 0
    %949 = vmatpush1.bf16.msra.mxu0 0
    %950 = vmatprep.subr.bf16.mxu0 0
    %951 = vmatpush1.bf16.msra.mxu0 0
    %952 = vmatprep.subr.bf16.mxu0 0
    %953 = vmatpush1.bf16.msra.mxu0 0
    %954 = vmatprep.subr.bf16.mxu0 0
    %955 = vmatpush1.bf16.msra.mxu0 0
    %956 = vmatprep.subr.bf16.mxu0 0
    %957 = vmatpush1.bf16.msra.mxu0 0
    %958 = vmatprep.subr.bf16.mxu0 0
    %959 = vmatpush1.bf16.msra.mxu0 0
    %960 = vmatprep.mubr.bf16.mxu0 0
    %961 = vmatmul.mubr.bf16.gmra.mrb[0].mxu0 %v844
    %v962 = vpop.f32.mrb[0].mxu0
    %v963 = vadd.f32 0.0, %v962
    %v964 = vpop.f32.mrb[0].mxu0
    %v965 = vadd.f32 0.0, %v964
    %v966 = vpop.f32.mrb[0].mxu0
    %v967 = vpop.f32.mrb[0].mxu0
    %968 = vdwg.mxu0
    %969 = vmatprep.subr.bf16.mxu0 %v834
    %970 = vmatpush1.bf16.msra.mxu0 %v833
    %971 = vmatprep.subr.bf16.mxu0 0
    %972 = vmatpush1.bf16.msra.mxu0 0
    %973 = vmatprep.subr.bf16.mxu0 0
    %974 = vmatpush1.bf16.msra.mxu0 0
    %975 = vmatprep.subr.bf16.mxu0 0
    %976 = vmatpush1.bf16.msra.mxu0 0
    %977 = vmatprep.subr.bf16.mxu0 0
    %978 = vmatpush1.bf16.msra.mxu0 0
    %979 = vmatprep.subr.bf16.mxu0 0
    %980 = vmatpush1.bf16.msra.mxu0 0
    %981 = vmatprep.subr.bf16.mxu0 0
    %982 = vmatpush1.bf16.msra.mxu0 0
    %983 = vmatprep.subr.bf16.mxu0 0
    %984 = vmatpush1.bf16.msra.mxu0 0
    %985 = vmatprep.subr.bf16.mxu0 0
    %986 = vmatpush1.bf16.msra.mxu0 0
    %987 = vmatprep.subr.bf16.mxu0 0
    %988 = vmatpush1.bf16.msra.mxu0 0
    %989 = vmatprep.subr.bf16.mxu0 0
    %990 = vmatpush1.bf16.msra.mxu0 0
    %991 = vmatprep.subr.bf16.mxu0 0
    %992 = vmatpush1.bf16.msra.mxu0 0
    %993 = vmatprep.subr.bf16.mxu0 0
    %994 = vmatpush1.bf16.msra.mxu0 0
    %995 = vmatprep.subr.bf16.mxu0 0
    %996 = vmatpush1.bf16.msra.mxu0 0
    %997 = vmatprep.subr.bf16.mxu0 0
    %998 = vmatpush1.bf16.msra.mxu0 0
    %999 = vmatprep.subr.bf16.mxu0 0
    %1000 = vmatpush1.bf16.msra.mxu0 0
    %1001 = vmatprep.mubr.bf16.mxu0 0
    %1002 = vmatmul.mubr.bf16.gmra.mrb[0].mxu0 %v844
    %v1003 = vpop.f32.mrb[0].mxu0
    %v1004 = vadd.f32 0.0, %v1003
    %v1005 = vpop.f32.mrb[0].mxu0
    %v1006 = vadd.f32 0.0, %v1005
    %v1007 = vpop.f32.mrb[0].mxu0
    %v1008 = vpop.f32.mrb[0].mxu0
    %1009 = vdwg.mxu0
    %v1010 = vrcp.pop %v787
    %v1011 = vmul.f32 1.0, %v1010
    %v1012 = vmul.f32 %v782, %v1011
    %v1013 = vmul.f32 %v881, %v1011
    %v1014 = vmul.f32 %v883, %v1011
    %v1015 = vmul.f32 %v922, %v1011
    %v1016 = vmul.f32 %v924, %v1011
    %v1017 = vmul.f32 %v963, %v1011
    %v1018 = vmul.f32 %v965, %v1011
    %v1019 = vmul.f32 %v1004, %v1011
    %v1020 = vmul.f32 %v1006, %v1011
    %v1022 = vlaneseq
    %v1023 = vshrl.u32 %v1022, 7
    %v1024 = vsub.s32 0, %v1023
    %v1025 = vrot.slane %v78, %v1024
    %v1026 = vlaneseq
    %v1027 = vshrl.u32 %v1026, 7
    %v1028 = vsub.s32 1, %v1027
    %v1029 = vrot.slane %v78, %v1028
    %v1030 = vlaneseq
    %v1031 = vshrl.u32 %v1030, 7
    %v1032 = vsub.s32 2, %v1031
    %v1033 = vrot.slane %v78, %v1032
    %v1034 = vlaneseq
    %v1035 = vshrl.u32 %v1034, 7
    %v1036 = vsub.s32 3, %v1035
    %v1037 = vrot.slane %v78, %v1036
    %v1038 = vlaneseq
    %v1039 = vshrl.u32 %v1038, 7
    %v1040 = vsub.s32 4, %v1039
    %v1041 = vrot.slane %v78, %v1040
    %v1042 = vlaneseq
    %v1043 = vshrl.u32 %v1042, 7
    %v1044 = vsub.s32 5, %v1043
    %v1045 = vrot.slane %v78, %v1044
    %v1046 = vlaneseq
    %v1047 = vshrl.u32 %v1046, 7
    %v1048 = vsub.s32 6, %v1047
    %v1049 = vrot.slane %v78, %v1048
    %v1050 = vlaneseq
    %v1051 = vshrl.u32 %v1050, 7
    %v1052 = vsub.s32 7, %v1051
    %v1053 = vrot.slane %v78, %v1052
    %v1062 = vadd.f32 %v1013, %v1025
    %v1063 = vadd.f32 %v1014, %v1029
    %v1064 = vadd.f32 %v1015, %v1033
    %v1065 = vadd.f32 %v1016, %v1037
    %v1066 = vadd.f32 %v1017, %v1041
    %v1067 = vadd.f32 %v1018, %v1045
    %v1068 = vadd.f32 %v1019, %v1049
    %v1069 = vadd.f32 %v1020, %v1053
    %vm1070 = vcmp.gt.f32.partialorder %v1062, 0.0
    %vm1071 = vcmp.gt.f32.partialorder %v1063, 0.0
    %vm1072 = vcmp.gt.f32.partialorder %v1064, 0.0
    %vm1073 = vcmp.gt.f32.partialorder %v1065, 0.0
    %vm1074 = vcmp.gt.f32.partialorder %v1066, 0.0
    %vm1075 = vcmp.gt.f32.partialorder %v1067, 0.0
    %vm1076 = vcmp.gt.f32.partialorder %v1068, 0.0
    %vm1077 = vcmp.gt.f32.partialorder %v1069, 0.0
    %v1078 = vmul.f32 %v1062, 0.01
    %v1079 = vmul.f32 %v1063, 0.01
    %v1080 = vmul.f32 %v1064, 0.01
    %v1081 = vmul.f32 %v1065, 0.01
    %v1082 = vmul.f32 %v1066, 0.01
    %v1083 = vmul.f32 %v1067, 0.01
    %v1084 = vmul.f32 %v1068, 0.01
    %v1085 = vmul.f32 %v1069, 0.01
    %v1086 = vsel %vm1070, %v1062, %v1078
    %v1087 = vsel %vm1071, %v1063, %v1079
    %v1088 = vsel %vm1072, %v1064, %v1080
    %v1089 = vsel %vm1073, %v1065, %v1081
    %v1090 = vsel %vm1074, %v1066, %v1082
    %v1091 = vsel %vm1075, %v1067, %v1083
    %v1092 = vsel %vm1076, %v1068, %v1084
    %v1093 = vsel %vm1077, %v1069, %v1085
    %v1094 = vpack.c.bf16 %v1086, %v1086
    %v1095 = vpack.c.bf16 %v1087, %v1087
    %v1096 = vpack.c.bf16 %v1088, %v1088
    %v1097 = vpack.c.bf16 %v1089, %v1089
    %v1098 = vpack.c.bf16 %v1090, %v1090
    %v1099 = vpack.c.bf16 %v1091, %v1091
    %v1100 = vpack.c.bf16 %v1092, %v1092
    %v1101 = vpack.c.bf16 %v1093, %v1093
    %v1102 = vld [vmem:[%s5] sm:$0xf]
    %v1103 = vld [vmem:[%s5 + $0x4] sm:$0xf]
    %v1104 = vld [vmem:[%s5 + $0x8] sm:$0xf]
    %v1105 = vld [vmem:[%s5 + $0xc] sm:$0xf]
    %v1106 = vld [vmem:[%s5 + $0x10] sm:$0xf]
    %v1107 = vld [vmem:[%s5 + $0x14] sm:$0xf]
    %v1108 = vld [vmem:[%s5 + $0x18] sm:$0xf]
    %v1109 = vld [vmem:[%s5 + $0x1c] sm:$0xf]
    %v1110 = vld [vmem:[%s5 + $0x20] sm:$0xf]
    %v1111 = vld [vmem:[%s5 + $0x24] sm:$0xf]
    %v1112 = vld [vmem:[%s5 + $0x28] sm:$0xf]
    %v1113 = vld [vmem:[%s5 + $0x2c] sm:$0xf]
    %v1114 = vld [vmem:[%s5 + $0x30] sm:$0xf]
    %v1115 = vld [vmem:[%s5 + $0x34] sm:$0xf]
    %v1116 = vld [vmem:[%s5 + $0x38] sm:$0xf]
    %v1117 = vld [vmem:[%s5 + $0x3c] sm:$0xf]
    %v1118 = vld [vmem:[%s5 + $0x40] sm:$0xf]
    %v1119 = vld [vmem:[%s5 + $0x44] sm:$0xf]
    %v1120 = vld [vmem:[%s5 + $0x48] sm:$0xf]
    %v1121 = vld [vmem:[%s5 + $0x4c] sm:$0xf]
    %v1122 = vld [vmem:[%s5 + $0x50] sm:$0xf]
    %v1123 = vld [vmem:[%s5 + $0x54] sm:$0xf]
    %v1124 = vld [vmem:[%s5 + $0x58] sm:$0xf]
    %v1125 = vld [vmem:[%s5 + $0x5c] sm:$0xf]
    %v1126 = vld [vmem:[%s5 + $0x60] sm:$0xf]
    %v1127 = vld [vmem:[%s5 + $0x64] sm:$0xf]
    %v1128 = vld [vmem:[%s5 + $0x68] sm:$0xf]
    %v1129 = vld [vmem:[%s5 + $0x6c] sm:$0xf]
    %v1130 = vld [vmem:[%s5 + $0x70] sm:$0xf]
    %v1131 = vld [vmem:[%s5 + $0x74] sm:$0xf]
    %v1132 = vld [vmem:[%s5 + $0x78] sm:$0xf]
    %v1133 = vld [vmem:[%s5 + $0x7c] sm:$0xf]
    %v1134 = vld [vmem:[%s5 + $0x80] sm:$0xf]
    %v1135 = vld [vmem:[%s5 + $0x84] sm:$0xf]
    %v1136 = vld [vmem:[%s5 + $0x88] sm:$0xf]
    %v1137 = vld [vmem:[%s5 + $0x8c] sm:$0xf]
    %v1138 = vld [vmem:[%s5 + $0x90] sm:$0xf]
    %v1139 = vld [vmem:[%s5 + $0x94] sm:$0xf]
    %v1140 = vld [vmem:[%s5 + $0x98] sm:$0xf]
    %v1141 = vld [vmem:[%s5 + $0x9c] sm:$0xf]
    %v1142 = vld [vmem:[%s5 + $0xa0] sm:$0xf]
    %v1143 = vld [vmem:[%s5 + $0xa4] sm:$0xf]
    %v1144 = vld [vmem:[%s5 + $0xa8] sm:$0xf]
    %v1145 = vld [vmem:[%s5 + $0xac] sm:$0xf]
    %v1146 = vld [vmem:[%s5 + $0xb0] sm:$0xf]
    %v1147 = vld [vmem:[%s5 + $0xb4] sm:$0xf]
    %v1148 = vld [vmem:[%s5 + $0xb8] sm:$0xf]
    %v1149 = vld [vmem:[%s5 + $0xbc] sm:$0xf]
    %v1150 = vld [vmem:[%s5 + $0xc0] sm:$0xf]
    %v1151 = vld [vmem:[%s5 + $0xc4] sm:$0xf]
    %v1152 = vld [vmem:[%s5 + $0xc8] sm:$0xf]
    %v1153 = vld [vmem:[%s5 + $0xcc] sm:$0xf]
    %v1154 = vld [vmem:[%s5 + $0xd0] sm:$0xf]
    %v1155 = vld [vmem:[%s5 + $0xd4] sm:$0xf]
    %v1156 = vld [vmem:[%s5 + $0xd8] sm:$0xf]
    %v1157 = vld [vmem:[%s5 + $0xdc] sm:$0xf]
    %v1158 = vld [vmem:[%s5 + $0xe0] sm:$0xf]
    %v1159 = vld [vmem:[%s5 + $0xe4] sm:$0xf]
    %v1160 = vld [vmem:[%s5 + $0xe8] sm:$0xf]
    %v1161 = vld [vmem:[%s5 + $0xec] sm:$0xf]
    %v1162 = vld [vmem:[%s5 + $0xf0] sm:$0xf]
    %v1163 = vld [vmem:[%s5 + $0xf4] sm:$0xf]
    %v1164 = vld [vmem:[%s5 + $0xf8] sm:$0xf]
    %v1165 = vld [vmem:[%s5 + $0xfc] sm:$0xf]
    %v1166 = vld [vmem:[%s5 + $0x100] sm:$0xf]
    %v1167 = vld [vmem:[%s5 + $0x104] sm:$0xf]
    %v1168 = vld [vmem:[%s5 + $0x108] sm:$0xf]
    %v1169 = vld [vmem:[%s5 + $0x10c] sm:$0xf]
    %v1170 = vld [vmem:[%s5 + $0x110] sm:$0xf]
    %v1171 = vld [vmem:[%s5 + $0x114] sm:$0xf]
    %v1172 = vld [vmem:[%s5 + $0x118] sm:$0xf]
    %v1173 = vld [vmem:[%s5 + $0x11c] sm:$0xf]
    %v1174 = vld [vmem:[%s5 + $0x120] sm:$0xf]
    %v1175 = vld [vmem:[%s5 + $0x124] sm:$0xf]
    %v1176 = vld [vmem:[%s5 + $0x128] sm:$0xf]
    %v1177 = vld [vmem:[%s5 + $0x12c] sm:$0xf]
    %v1178 = vld [vmem:[%s5 + $0x130] sm:$0xf]
    %v1179 = vld [vmem:[%s5 + $0x134] sm:$0xf]
    %v1180 = vld [vmem:[%s5 + $0x138] sm:$0xf]
    %v1181 = vld [vmem:[%s5 + $0x13c] sm:$0xf]
    %v1182 = vld [vmem:[%s5 + $0x140] sm:$0xf]
    %v1183 = vld [vmem:[%s5 + $0x144] sm:$0xf]
    %v1184 = vld [vmem:[%s5 + $0x148] sm:$0xf]
    %v1185 = vld [vmem:[%s5 + $0x14c] sm:$0xf]
    %v1186 = vld [vmem:[%s5 + $0x150] sm:$0xf]
    %v1187 = vld [vmem:[%s5 + $0x154] sm:$0xf]
    %v1188 = vld [vmem:[%s5 + $0x158] sm:$0xf]
    %v1189 = vld [vmem:[%s5 + $0x15c] sm:$0xf]
    %v1190 = vld [vmem:[%s5 + $0x160] sm:$0xf]
    %v1191 = vld [vmem:[%s5 + $0x164] sm:$0xf]
    %v1192 = vld [vmem:[%s5 + $0x168] sm:$0xf]
    %v1193 = vld [vmem:[%s5 + $0x16c] sm:$0xf]
    %v1194 = vld [vmem:[%s5 + $0x170] sm:$0xf]
    %v1195 = vld [vmem:[%s5 + $0x174] sm:$0xf]
    %v1196 = vld [vmem:[%s5 + $0x178] sm:$0xf]
    %v1197 = vld [vmem:[%s5 + $0x17c] sm:$0xf]
    %v1198 = vld [vmem:[%s5 + $0x180] sm:$0xf]
    %v1199 = vld [vmem:[%s5 + $0x184] sm:$0xf]
    %v1200 = vld [vmem:[%s5 + $0x188] sm:$0xf]
    %v1201 = vld [vmem:[%s5 + $0x18c] sm:$0xf]
    %v1202 = vld [vmem:[%s5 + $0x190] sm:$0xf]
    %v1203 = vld [vmem:[%s5 + $0x194] sm:$0xf]
    %v1204 = vld [vmem:[%s5 + $0x198] sm:$0xf]
    %v1205 = vld [vmem:[%s5 + $0x19c] sm:$0xf]
    %v1206 = vld [vmem:[%s5 + $0x1a0] sm:$0xf]
    %v1207 = vld [vmem:[%s5 + $0x1a4] sm:$0xf]
    %v1208 = vld [vmem:[%s5 + $0x1a8] sm:$0xf]
    %v1209 = vld [vmem:[%s5 + $0x1ac] sm:$0xf]
    %v1210 = vld [vmem:[%s5 + $0x1b0] sm:$0xf]
    %v1211 = vld [vmem:[%s5 + $0x1b4] sm:$0xf]
    %v1212 = vld [vmem:[%s5 + $0x1b8] sm:$0xf]
    %v1213 = vld [vmem:[%s5 + $0x1bc] sm:$0xf]
    %v1214 = vld [vmem:[%s5 + $0x1c0] sm:$0xf]
    %v1215 = vld [vmem:[%s5 + $0x1c4] sm:$0xf]
    %v1216 = vld [vmem:[%s5 + $0x1c8] sm:$0xf]
    %v1217 = vld [vmem:[%s5 + $0x1cc] sm:$0xf]
    %v1218 = vld [vmem:[%s5 + $0x1d0] sm:$0xf]
    %v1219 = vld [vmem:[%s5 + $0x1d4] sm:$0xf]
    %v1220 = vld [vmem:[%s5 + $0x1d8] sm:$0xf]
    %v1221 = vld [vmem:[%s5 + $0x1dc] sm:$0xf]
    %v1222 = vld [vmem:[%s5 + $0x1e0] sm:$0xf]
    %v1223 = vld [vmem:[%s5 + $0x1e4] sm:$0xf]
    %v1224 = vld [vmem:[%s5 + $0x1e8] sm:$0xf]
    %v1225 = vld [vmem:[%s5 + $0x1ec] sm:$0xf]
    %v1226 = vld [vmem:[%s5 + $0x1f0] sm:$0xf]
    %v1227 = vld [vmem:[%s5 + $0x1f4] sm:$0xf]
    %v1228 = vld [vmem:[%s5 + $0x1f8] sm:$0xf]
    %v1229 = vld [vmem:[%s5 + $0x1fc] sm:$0xf]
    %v1231 = vlaneseq
    %v1232 = vshrl.u32 %v1231, 7
    %v1233 = vsub.s32 0, %v1232
    %v1234 = vrot.slane %v79, %v1233
    %v1364 = vunpack.c.l.b16 %v1102
    %v1365 = vunpack.c.l.b16 %v1103
    %v1366 = vunpack.c.l.b16 %v1104
    %v1367 = vunpack.c.l.b16 %v1105
    %v1368 = vunpack.c.l.b16 %v1106
    %v1369 = vunpack.c.l.b16 %v1107
    %v1370 = vunpack.c.l.b16 %v1108
    %v1371 = vunpack.c.l.b16 %v1109
    %v1372 = vunpack.c.l.b16 %v1110
    %v1373 = vunpack.c.l.b16 %v1111
    %v1374 = vunpack.c.l.b16 %v1112
    %v1375 = vunpack.c.l.b16 %v1113
    %v1376 = vunpack.c.l.b16 %v1114
    %v1377 = vunpack.c.l.b16 %v1115
    %v1378 = vunpack.c.l.b16 %v1116
    %v1379 = vunpack.c.l.b16 %v1117
    %v1380 = vunpack.c.l.b16 %v1118
    %v1381 = vunpack.c.l.b16 %v1119
    %v1382 = vunpack.c.l.b16 %v1120
    %v1383 = vunpack.c.l.b16 %v1121
    %v1384 = vunpack.c.l.b16 %v1122
    %v1385 = vunpack.c.l.b16 %v1123
    %v1386 = vunpack.c.l.b16 %v1124
    %v1387 = vunpack.c.l.b16 %v1125
    %v1388 = vunpack.c.l.b16 %v1126
    %v1389 = vunpack.c.l.b16 %v1127
    %v1390 = vunpack.c.l.b16 %v1128
    %v1391 = vunpack.c.l.b16 %v1129
    %v1392 = vunpack.c.l.b16 %v1130
    %v1393 = vunpack.c.l.b16 %v1131
    %v1394 = vunpack.c.l.b16 %v1132
    %v1395 = vunpack.c.l.b16 %v1133
    %v1396 = vunpack.c.l.b16 %v1134
    %v1397 = vunpack.c.l.b16 %v1135
    %v1398 = vunpack.c.l.b16 %v1136
    %v1399 = vunpack.c.l.b16 %v1137
    %v1400 = vunpack.c.l.b16 %v1138
    %v1401 = vunpack.c.l.b16 %v1139
    %v1402 = vunpack.c.l.b16 %v1140
    %v1403 = vunpack.c.l.b16 %v1141
    %v1404 = vunpack.c.l.b16 %v1142
    %v1405 = vunpack.c.l.b16 %v1143
    %v1406 = vunpack.c.l.b16 %v1144
    %v1407 = vunpack.c.l.b16 %v1145
    %v1408 = vunpack.c.l.b16 %v1146
    %v1409 = vunpack.c.l.b16 %v1147
    %v1410 = vunpack.c.l.b16 %v1148
    %v1411 = vunpack.c.l.b16 %v1149
    %v1412 = vunpack.c.l.b16 %v1150
    %v1413 = vunpack.c.l.b16 %v1151
    %v1414 = vunpack.c.l.b16 %v1152
    %v1415 = vunpack.c.l.b16 %v1153
    %v1416 = vunpack.c.l.b16 %v1154
    %v1417 = vunpack.c.l.b16 %v1155
    %v1418 = vunpack.c.l.b16 %v1156
    %v1419 = vunpack.c.l.b16 %v1157
    %v1420 = vunpack.c.l.b16 %v1158
    %v1421 = vunpack.c.l.b16 %v1159
    %v1422 = vunpack.c.l.b16 %v1160
    %v1423 = vunpack.c.l.b16 %v1161
    %v1424 = vunpack.c.l.b16 %v1162
    %v1425 = vunpack.c.l.b16 %v1163
    %v1426 = vunpack.c.l.b16 %v1164
    %v1427 = vunpack.c.l.b16 %v1165
    %v1428 = vunpack.c.l.b16 %v1166
    %v1429 = vunpack.c.l.b16 %v1167
    %v1430 = vunpack.c.l.b16 %v1168
    %v1431 = vunpack.c.l.b16 %v1169
    %v1432 = vunpack.c.l.b16 %v1170
    %v1433 = vunpack.c.l.b16 %v1171
    %v1434 = vunpack.c.l.b16 %v1172
    %v1435 = vunpack.c.l.b16 %v1173
    %v1436 = vunpack.c.l.b16 %v1174
    %v1437 = vunpack.c.l.b16 %v1175
    %v1438 = vunpack.c.l.b16 %v1176
    %v1439 = vunpack.c.l.b16 %v1177
    %v1440 = vunpack.c.l.b16 %v1178
    %v1441 = vunpack.c.l.b16 %v1179
    %v1442 = vunpack.c.l.b16 %v1180
    %v1443 = vunpack.c.l.b16 %v1181
    %v1444 = vunpack.c.l.b16 %v1182
    %v1445 = vunpack.c.l.b16 %v1183
    %v1446 = vunpack.c.l.b16 %v1184
    %v1447 = vunpack.c.l.b16 %v1185
    %v1448 = vunpack.c.l.b16 %v1186
    %v1449 = vunpack.c.l.b16 %v1187
    %v1450 = vunpack.c.l.b16 %v1188
    %v1451 = vunpack.c.l.b16 %v1189
    %v1452 = vunpack.c.l.b16 %v1190
    %v1453 = vunpack.c.l.b16 %v1191
    %v1454 = vunpack.c.l.b16 %v1192
    %v1455 = vunpack.c.l.b16 %v1193
    %v1456 = vunpack.c.l.b16 %v1194
    %v1457 = vunpack.c.l.b16 %v1195
    %v1458 = vunpack.c.l.b16 %v1196
    %v1459 = vunpack.c.l.b16 %v1197
    %v1460 = vunpack.c.l.b16 %v1198
    %v1461 = vunpack.c.l.b16 %v1199
    %v1462 = vunpack.c.l.b16 %v1200
    %v1463 = vunpack.c.l.b16 %v1201
    %v1464 = vunpack.c.l.b16 %v1202
    %v1465 = vunpack.c.l.b16 %v1203
    %v1466 = vunpack.c.l.b16 %v1204
    %v1467 = vunpack.c.l.b16 %v1205
    %v1468 = vunpack.c.l.b16 %v1206
    %v1469 = vunpack.c.l.b16 %v1207
    %v1470 = vunpack.c.l.b16 %v1208
    %v1471 = vunpack.c.l.b16 %v1209
    %v1472 = vunpack.c.l.b16 %v1210
    %v1473 = vunpack.c.l.b16 %v1211
    %v1474 = vunpack.c.l.b16 %v1212
    %v1475 = vunpack.c.l.b16 %v1213
    %v1476 = vunpack.c.l.b16 %v1214
    %v1477 = vunpack.c.l.b16 %v1215
    %v1478 = vunpack.c.l.b16 %v1216
    %v1479 = vunpack.c.l.b16 %v1217
    %v1480 = vunpack.c.l.b16 %v1218
    %v1481 = vunpack.c.l.b16 %v1219
    %v1482 = vunpack.c.l.b16 %v1220
    %v1483 = vunpack.c.l.b16 %v1221
    %v1484 = vunpack.c.l.b16 %v1222
    %v1485 = vunpack.c.l.b16 %v1223
    %v1486 = vunpack.c.l.b16 %v1224
    %v1487 = vunpack.c.l.b16 %v1225
    %v1488 = vunpack.c.l.b16 %v1226
    %v1489 = vunpack.c.l.b16 %v1227
    %v1490 = vunpack.c.l.b16 %v1228
    %v1491 = vunpack.c.l.b16 %v1229
    %v1492 = vpack.c.b16 %v1365, %v1364
    %v1493 = vpack.c.b16 %v1367, %v1366
    %v1494 = vpack.c.b16 %v1369, %v1368
    %v1495 = vpack.c.b16 %v1371, %v1370
    %v1496 = vpack.c.b16 %v1373, %v1372
    %v1497 = vpack.c.b16 %v1375, %v1374
    %v1498 = vpack.c.b16 %v1377, %v1376
    %v1499 = vpack.c.b16 %v1379, %v1378
    %v1500 = vpack.c.b16 %v1381, %v1380
    %v1501 = vpack.c.b16 %v1383, %v1382
    %v1502 = vpack.c.b16 %v1385, %v1384
    %v1503 = vpack.c.b16 %v1387, %v1386
    %v1504 = vpack.c.b16 %v1389, %v1388
    %v1505 = vpack.c.b16 %v1391, %v1390
    %v1506 = vpack.c.b16 %v1393, %v1392
    %v1507 = vpack.c.b16 %v1395, %v1394
    %v1508 = vpack.c.b16 %v1397, %v1396
    %v1509 = vpack.c.b16 %v1399, %v1398
    %v1510 = vpack.c.b16 %v1401, %v1400
    %v1511 = vpack.c.b16 %v1403, %v1402
    %v1512 = vpack.c.b16 %v1405, %v1404
    %v1513 = vpack.c.b16 %v1407, %v1406
    %v1514 = vpack.c.b16 %v1409, %v1408
    %v1515 = vpack.c.b16 %v1411, %v1410
    %v1516 = vpack.c.b16 %v1413, %v1412
    %v1517 = vpack.c.b16 %v1415, %v1414
    %v1518 = vpack.c.b16 %v1417, %v1416
    %v1519 = vpack.c.b16 %v1419, %v1418
    %v1520 = vpack.c.b16 %v1421, %v1420
    %v1521 = vpack.c.b16 %v1423, %v1422
    %v1522 = vpack.c.b16 %v1425, %v1424
    %v1523 = vpack.c.b16 %v1427, %v1426
    %v1524 = vpack.c.b16 %v1429, %v1428
    %v1525 = vpack.c.b16 %v1431, %v1430
    %v1526 = vpack.c.b16 %v1433, %v1432
    %v1527 = vpack.c.b16 %v1435, %v1434
    %v1528 = vpack.c.b16 %v1437, %v1436
    %v1529 = vpack.c.b16 %v1439, %v1438
    %v1530 = vpack.c.b16 %v1441, %v1440
    %v1531 = vpack.c.b16 %v1443, %v1442
    %v1532 = vpack.c.b16 %v1445, %v1444
    %v1533 = vpack.c.b16 %v1447, %v1446
    %v1534 = vpack.c.b16 %v1449, %v1448
    %v1535 = vpack.c.b16 %v1451, %v1450
    %v1536 = vpack.c.b16 %v1453, %v1452
    %v1537 = vpack.c.b16 %v1455, %v1454
    %v1538 = vpack.c.b16 %v1457, %v1456
    %v1539 = vpack.c.b16 %v1459, %v1458
    %v1540 = vpack.c.b16 %v1461, %v1460
    %v1541 = vpack.c.b16 %v1463, %v1462
    %v1542 = vpack.c.b16 %v1465, %v1464
    %v1543 = vpack.c.b16 %v1467, %v1466
    %v1544 = vpack.c.b16 %v1469, %v1468
    %v1545 = vpack.c.b16 %v1471, %v1470
    %v1546 = vpack.c.b16 %v1473, %v1472
    %v1547 = vpack.c.b16 %v1475, %v1474
    %v1548 = vpack.c.b16 %v1477, %v1476
    %v1549 = vpack.c.b16 %v1479, %v1478
    %v1550 = vpack.c.b16 %v1481, %v1480
    %v1551 = vpack.c.b16 %v1483, %v1482
    %v1552 = vpack.c.b16 %v1485, %v1484
    %v1553 = vpack.c.b16 %v1487, %v1486
    %v1554 = vpack.c.b16 %v1489, %v1488
    %v1555 = vpack.c.b16 %v1491, %v1490
    %1620 = vmatprep.subr.bf16.mxu0 0
    %1621 = vmatpush1.bf16.msra.mxu0 %v1492
    %1622 = vmatprep.subr.bf16.mxu0 0
    %1623 = vmatpush1.bf16.msra.mxu0 %v1493
    %1624 = vmatprep.subr.bf16.mxu0 0
    %1625 = vmatpush1.bf16.msra.mxu0 %v1494
    %1626 = vmatprep.subr.bf16.mxu0 0
    %1627 = vmatpush1.bf16.msra.mxu0 %v1495
    %1628 = vmatprep.subr.bf16.mxu0 0
    %1629 = vmatpush1.bf16.msra.mxu0 %v1496
    %1630 = vmatprep.subr.bf16.mxu0 0
    %1631 = vmatpush1.bf16.msra.mxu0 %v1497
    %1632 = vmatprep.subr.bf16.mxu0 0
    %1633 = vmatpush1.bf16.msra.mxu0 %v1498
    %1634 = vmatprep.subr.bf16.mxu0 0
    %1635 = vmatpush1.bf16.msra.mxu0 %v1499
    %1636 = vmatprep.subr.bf16.mxu0 0
    %1637 = vmatpush1.bf16.msra.mxu0 %v1500
    %1638 = vmatprep.subr.bf16.mxu0 0
    %1639 = vmatpush1.bf16.msra.mxu0 %v1501
    %1640 = vmatprep.subr.bf16.mxu0 0
    %1641 = vmatpush1.bf16.msra.mxu0 %v1502
    %1642 = vmatprep.subr.bf16.mxu0 0
    %1643 = vmatpush1.bf16.msra.mxu0 %v1503
    %1644 = vmatprep.subr.bf16.mxu0 0
    %1645 = vmatpush1.bf16.msra.mxu0 %v1504
    %1646 = vmatprep.subr.bf16.mxu0 0
    %1647 = vmatpush1.bf16.msra.mxu0 %v1505
    %1648 = vmatprep.subr.bf16.mxu0 0
    %1649 = vmatpush1.bf16.msra.mxu0 %v1506
    %1650 = vmatprep.subr.bf16.mxu0 0
    %1651 = vmatpush1.bf16.msra.mxu0 %v1507
    %1652 = vmatprep.mubr.bf16.mxu0 %v1095
    %1653 = vmatmul.mubr.bf16.gmra.mrb[0].mxu0 %v1094
    %v1654 = vpop.f32.mrb[0].mxu0
    %v1655 = vadd.f32 %v1234, %v1654
    %v1656 = vpop.f32.mrb[0].mxu0
    %v1657 = vpop.f32.mrb[0].mxu0
    %v1658 = vpop.f32.mrb[0].mxu0
    %1659 = vdwg.mxu0
    %1660 = vmatprep.subr.bf16.mxu0 0
    %1661 = vmatpush1.bf16.msra.mxu0 %v1508
    %1662 = vmatprep.subr.bf16.mxu0 0
    %1663 = vmatpush1.bf16.msra.mxu0 %v1509
    %1664 = vmatprep.subr.bf16.mxu0 0
    %1665 = vmatpush1.bf16.msra.mxu0 %v1510
    %1666 = vmatprep.subr.bf16.mxu0 0
    %1667 = vmatpush1.bf16.msra.mxu0 %v1511
    %1668 = vmatprep.subr.bf16.mxu0 0
    %1669 = vmatpush1.bf16.msra.mxu0 %v1512
    %1670 = vmatprep.subr.bf16.mxu0 0
    %1671 = vmatpush1.bf16.msra.mxu0 %v1513
    %1672 = vmatprep.subr.bf16.mxu0 0
    %1673 = vmatpush1.bf16.msra.mxu0 %v1514
    %1674 = vmatprep.subr.bf16.mxu0 0
    %1675 = vmatpush1.bf16.msra.mxu0 %v1515
    %1676 = vmatprep.subr.bf16.mxu0 0
    %1677 = vmatpush1.bf16.msra.mxu0 %v1516
    %1678 = vmatprep.subr.bf16.mxu0 0
    %1679 = vmatpush1.bf16.msra.mxu0 %v1517
    %1680 = vmatprep.subr.bf16.mxu0 0
    %1681 = vmatpush1.bf16.msra.mxu0 %v1518
    %1682 = vmatprep.subr.bf16.mxu0 0
    %1683 = vmatpush1.bf16.msra.mxu0 %v1519
    %1684 = vmatprep.subr.bf16.mxu0 0
    %1685 = vmatpush1.bf16.msra.mxu0 %v1520
    %1686 = vmatprep.subr.bf16.mxu0 0
    %1687 = vmatpush1.bf16.msra.mxu0 %v1521
    %1688 = vmatprep.subr.bf16.mxu0 0
    %1689 = vmatpush1.bf16.msra.mxu0 %v1522
    %1690 = vmatprep.subr.bf16.mxu0 0
    %1691 = vmatpush1.bf16.msra.mxu0 %v1523
    %1692 = vmatprep.mubr.bf16.mxu0 %v1097
    %1693 = vmatmul.mubr.bf16.gmra.mrb[0].mxu0 %v1096
    %v1694 = vpop.f32.mrb[0].mxu0
    %v1695 = vadd.f32 %v1655, %v1694
    %v1696 = vpop.f32.mrb[0].mxu0
    %v1697 = vpop.f32.mrb[0].mxu0
    %v1698 = vpop.f32.mrb[0].mxu0
    %1699 = vdwg.mxu0
    %1700 = vmatprep.subr.bf16.mxu0 0
    %1701 = vmatpush1.bf16.msra.mxu0 %v1524
    %1702 = vmatprep.subr.bf16.mxu0 0
    %1703 = vmatpush1.bf16.msra.mxu0 %v1525
    %1704 = vmatprep.subr.bf16.mxu0 0
    %1705 = vmatpush1.bf16.msra.mxu0 %v1526
    %1706 = vmatprep.subr.bf16.mxu0 0
    %1707 = vmatpush1.bf16.msra.mxu0 %v1527
    %1708 = vmatprep.subr.bf16.mxu0 0
    %1709 = vmatpush1.bf16.msra.mxu0 %v1528
    %1710 = vmatprep.subr.bf16.mxu0 0
    %1711 = vmatpush1.bf16.msra.mxu0 %v1529
    %1712 = vmatprep.subr.bf16.mxu0 0
    %1713 = vmatpush1.bf16.msra.mxu0 %v1530
    %1714 = vmatprep.subr.bf16.mxu0 0
    %1715 = vmatpush1.bf16.msra.mxu0 %v1531
    %1716 = vmatprep.subr.bf16.mxu0 0
    %1717 = vmatpush1.bf16.msra.mxu0 %v1532
    %1718 = vmatprep.subr.bf16.mxu0 0
    %1719 = vmatpush1.bf16.msra.mxu0 %v1533
    %1720 = vmatprep.subr.bf16.mxu0 0
    %1721 = vmatpush1.bf16.msra.mxu0 %v1534
    %1722 = vmatprep.subr.bf16.mxu0 0
    %1723 = vmatpush1.bf16.msra.mxu0 %v1535
    %1724 = vmatprep.subr.bf16.mxu0 0
    %1725 = vmatpush1.bf16.msra.mxu0 %v1536
    %1726 = vmatprep.subr.bf16.mxu0 0
    %1727 = vmatpush1.bf16.msra.mxu0 %v1537
    %1728 = vmatprep.subr.bf16.mxu0 0
    %1729 = vmatpush1.bf16.msra.mxu0 %v1538
    %1730 = vmatprep.subr.bf16.mxu0 0
    %1731 = vmatpush1.bf16.msra.mxu0 %v1539
    %1732 = vmatprep.mubr.bf16.mxu0 %v1099
    %1733 = vmatmul.mubr.bf16.gmra.mrb[0].mxu0 %v1098
    %v1734 = vpop.f32.mrb[0].mxu0
    %v1735 = vadd.f32 %v1695, %v1734
    %v1736 = vpop.f32.mrb[0].mxu0
    %v1737 = vpop.f32.mrb[0].mxu0
    %v1738 = vpop.f32.mrb[0].mxu0
    %1739 = vdwg.mxu0
    %1740 = vmatprep.subr.bf16.mxu0 0
    %1741 = vmatpush1.bf16.msra.mxu0 %v1540
    %1742 = vmatprep.subr.bf16.mxu0 0
    %1743 = vmatpush1.bf16.msra.mxu0 %v1541
    %1744 = vmatprep.subr.bf16.mxu0 0
    %1745 = vmatpush1.bf16.msra.mxu0 %v1542
    %1746 = vmatprep.subr.bf16.mxu0 0
    %1747 = vmatpush1.bf16.msra.mxu0 %v1543
    %1748 = vmatprep.subr.bf16.mxu0 0
    %1749 = vmatpush1.bf16.msra.mxu0 %v1544
    %1750 = vmatprep.subr.bf16.mxu0 0
    %1751 = vmatpush1.bf16.msra.mxu0 %v1545
    %1752 = vmatprep.subr.bf16.mxu0 0
    %1753 = vmatpush1.bf16.msra.mxu0 %v1546
    %1754 = vmatprep.subr.bf16.mxu0 0
    %1755 = vmatpush1.bf16.msra.mxu0 %v1547
    %1756 = vmatprep.subr.bf16.mxu0 0
    %1757 = vmatpush1.bf16.msra.mxu0 %v1548
    %1758 = vmatprep.subr.bf16.mxu0 0
    %1759 = vmatpush1.bf16.msra.mxu0 %v1549
    %1760 = vmatprep.subr.bf16.mxu0 0
    %1761 = vmatpush1.bf16.msra.mxu0 %v1550
    %1762 = vmatprep.subr.bf16.mxu0 0
    %1763 = vmatpush1.bf16.msra.mxu0 %v1551
    %1764 = vmatprep.subr.bf16.mxu0 0
    %1765 = vmatpush1.bf16.msra.mxu0 %v1552
    %1766 = vmatprep.subr.bf16.mxu0 0
    %1767 = vmatpush1.bf16.msra.mxu0 %v1553
    %1768 = vmatprep.subr.bf16.mxu0 0
    %1769 = vmatpush1.bf16.msra.mxu0 %v1554
    %1770 = vmatprep.subr.bf16.mxu0 0
    %1771 = vmatpush1.bf16.msra.mxu0 %v1555
    %1772 = vmatprep.mubr.bf16.mxu0 %v1101
    %1773 = vmatmul.mubr.bf16.gmra.mrb[0].mxu0 %v1100
    %v1774 = vpop.f32.mrb[0].mxu0
    %v1775 = vadd.f32 %v1735, %v1774
    %v1776 = vpop.f32.mrb[0].mxu0
    %v1777 = vpop.f32.mrb[0].mxu0
    %v1778 = vpop.f32.mrb[0].mxu0
    %1779 = vdwg.mxu0
    %vm1780 = vcmp.gt.f32.partialorder %v1775, 0.0
    %v1781 = vmul.f32 %v1775, 0.01
    %v1782 = vsel %vm1780, %v1775, %v1781
    %v1783 = vmul.f32 %v1782, %v1782
    %vm1784 = vcmask 257024
    %v1785 = vsel %vm1784, %v1783, 0.0
    %1786 = vadd.xlane.f32.xlu0 %v1785
    %v1787 = vpop.xlane.xlu0 %1786
    %v1788 = vmax.f32 %v1787, 1e-24
    %v1789 = vrsqrt.pop %v1788
    %v1790 = vmul.f32 %v1788, 0.5
    %v1791 = vmul.f32 %v1790, %v1789
    %v1792 = vmul.f32 %v1791, %v1789
    %v1793 = vsub.f32 1.5, %v1792
    %v1794 = vmul.f32 %v1789, %v1793
    %v1795 = vmul.f32 %v1782, %v1794
    %v1797 = vlaneseq
    %v1798 = vshrl.u32 %v1797, 7
    %v1799 = vsub.s32 0, %v1798
    %v1800 = vrot.slane %v80, %v1799
    %v1802 = vmul.f32 %v1795, %v1800
    %v1803 = vsel %vm1784, %v1802, 0.0
    %1804 = vadd.xlane.f32.xlu0 %v1803
    %v1805 = vpop.xlane.xlu0 %1804
    %v1806 = vstv %s42
    %v1807 = vadd.f32 %v1805, %v1806
    %vm1808 = vcmask 3072
    %1809 = vst.msk [vmem:[%s7] sm:$0xf] %vm1808, %v1807
    %1810 = vst.msk [vmem:[%s7 + $0x4] sm:$0xf] %vm783, %v1012
    %1811 = vst.msk [vmem:[%s7 + $0x8] sm:$0xf] %vm1784, %v1795
    // Predicated region
    $region34: #{ssin_forward.1} parent=1 // pred_check
      _
    $region35: #{ssin_forward.1} parent=1 // pred_check_branch
      %1813 = sbr.rel (0) target = $region37
    $region36: #{ssin_forward.1} parent=1 // pred_region
      _
    $region37: #{ssin_forward.1} parent=1 // pred_fallthru
      _
    // Predicated region
    $region38: #{ssin_forward.1} parent=1 // pred_check
      _
    $region39: #{ssin_forward.1} parent=1 // pred_check_branch
      %1815 = sbr.rel (0) target = $region41
    $region40: #{ssin_forward.1} parent=1 // pred_region
      _
    $region41: #{ssin_forward.1} parent=1 // pred_fallthru
      _
    %1816 = vsyncpa [#allocation3], 1

</llo_original>
